<compile_context>
chip_gen: v5e
topology: v5e:2x2
jax: 0.10.0
libtpu: 0.0.40
codegen_flags: <defaults>
</compile_context>

<pallas_src>
import jax
import jax.numpy as jnp
from jax.experimental import pallas as pl
from jax.experimental.pallas import tpu as pltpu

_LANE = 128      # vreg lane width
_SUBLANE = 8     # vreg sublane width


def _round_up(x, m):
    return (x + m - 1) // m * m


# ----------------------------------------------------------------------------
# Kernels
# ----------------------------------------------------------------------------

def _make_decoder_kernel(compute_dtype, approx_sigmoid):
    """Fused 5-layer Bayesian-MLP decoder forward for one batch tile.

    Weights arrive already reparameterized (W = W_mu + softplus(W_logsigma)*eps_W)
    and pre-cast to `compute_dtype`; biases are f32.  Matmuls accumulate in f32;
    the inter-layer activation is narrowed to `compute_dtype` right after ReLU.
    """
    def kernel(z_ref, w1, b1, w2, b2, w3, b3, w4, b4, w5, b5, out_ref):
        def matmul_bias(x, w_ref, b_ref):
            y = jnp.dot(x, w_ref[...], preferred_element_type=jnp.float32)
            return y + b_ref[...]                    # bias add / ReLU stay in f32 (VPU)

        h = z_ref[...]                               # already compute_dtype
        for w_ref, b_ref in ((w1, b1), (w2, b2), (w3, b3), (w4, b4)):
            h = jnp.maximum(matmul_bias(h, w_ref, b_ref), 0.0).astype(compute_dtype)
        y = matmul_bias(h, w5, b5)                   # f32
        if approx_sigmoid:
            # exp on the EUP + approximate reciprocal (also EUP) -> VPU stays free.
            s = pl.reciprocal(1.0 + jnp.exp(-y), approx=True)
        else:
            s = jax.nn.sigmoid(y)
        out_ref[...] = s.astype(out_ref.dtype)

    return kernel


def _make_layer_kernel(activation, approx_sigmoid):
    """Single Bayesian-linear layer (matmul + bias + activation) for the
    large-dim_h fallback path."""
    def kernel(x_ref, w_ref, b_ref, out_ref):
        y = jnp.dot(x_ref[...], w_ref[...], preferred_element_type=jnp.float32)
        y = y + b_ref[...]
        if activation == "relu":
            y = jnp.maximum(y, 0.0)
        else:  # sigmoid
            if approx_sigmoid:
                y = pl.reciprocal(1.0 + jnp.exp(-y), approx=True)
            else:
                y = jax.nn.sigmoid(y)
        out_ref[...] = y.astype(out_ref.dtype)

    return kernel


# ----------------------------------------------------------------------------
# Spec / sizing helpers
# ----------------------------------------------------------------------------

def _resident_spec(shape, use_buffered):
    """BlockSpec for a grid-invariant (resident) block.

    With Buffered(1) the useless second pipeline buffer is dropped, halving the
    resident weight VMEM footprint.
    """
    index_map = lambda i: (0,) * len(shape)
    if use_buffered:
        return pl.BlockSpec(shape, index_map, pipeline_mode=pl.Buffered(1))
    return pl.BlockSpec(shape, index_map)


def _chip_info():
    """Return (vmem_capacity_bytes, tensorcores_per_chip) with safe fallbacks."""
    vmem = 128 * 1024 * 1024
    cores = 1
    try:
        info = pltpu.get_tpu_info()
        vmem = int(getattr(info, "vmem_capacity_bytes", vmem))
    except Exception:
        pass
    # v7x exposes 64 MiB VMEM per TensorCore and has 2 TCs per chip;
    # v5e / v6e have 128 MiB and a single TC.
    if vmem <= 64 * 1024 * 1024:
        cores = 2
    return vmem, cores


def _vmem_cap(vmem_capacity):
    if vmem_capacity <= 64 * 1024 * 1024:      # v7x-like: leave compiler headroom
        return 48 * 1024 * 1024
    return 100 * 1024 * 1024                   # v5e / v6e (128 MiB physical)


def _fused_vmem_estimate(pdims, tb, compute_bytes, out_bytes, weight_bufs):
    w = sum(pdims[i] * pdims[i + 1] for i in range(len(pdims) - 1)) * compute_bytes
    b = sum(pdims[1:]) * 4
    resident = (w + b) * weight_bufs
    z_stream = 2 * tb * pdims[0] * compute_bytes       # double-buffered input tile
    o_stream = 2 * tb * pdims[-1] * out_bytes          # double-buffered output tile
    live = tb * max(pdims) * (4 + 4 + compute_bytes)   # f32 acc + f32 relu + narrow h
    return int((resident + z_stream + o_stream + live) * 1.2) + (1 << 20)


def _layer_vmem_estimate(pi, po, tb, compute_bytes, out_bytes, weight_bufs):
    resident = (pi * po * compute_bytes + po * 4) * weight_bufs
    streams = 2 * tb * pi * compute_bytes + 2 * tb * po * out_bytes
    live = tb * po * 4
    return int((resident + streams + live) * 1.2) + (1 << 20)


# ----------------------------------------------------------------------------
# pallas_call wrappers
# ----------------------------------------------------------------------------

def _fused_call(z_p, padded, pdims, tb, B_pad, compute_dtype, out_dtype, cap,
                compute_bytes, out_bytes, approx_sigmoid, use_buffered, weight_bufs):
    kernel = _make_decoder_kernel(compute_dtype, approx_sigmoid)
    flat_args = [z_p]
    in_specs = [pl.BlockSpec((tb, pdims[0]), lambda i: (i, 0))]
    for li, (W_p, b_p) in enumerate(padded):
        pi, po = pdims[li], pdims[li + 1]
        flat_args += [W_p, b_p]
        in_specs += [_resident_spec((pi, po), use_buffered),
                     _resident_spec((1, po), use_buffered)]

    vmem_limit = min(cap, _fused_vmem_estimate(pdims, tb, compute_bytes,
                                               out_bytes, weight_bufs))
    return pl.pallas_call(
        kernel,
        out_shape=jax.ShapeDtypeStruct((B_pad, pdims[-1]), out_dtype),
        grid_spec=pl.GridSpec(
            grid=(B_pad // tb,),
            in_specs=in_specs,
            out_specs=pl.BlockSpec((tb, pdims[-1]), lambda i: (i, 0)),
        ),
        compiler_params=pltpu.CompilerParams(
            dimension_semantics=("parallel",),
            vmem_limit_bytes=int(vmem_limit),
        ),
    )(*flat_args)


def _per_layer_call(z_p, padded, pdims, tb, B_pad, compute_dtype, out_dtype, cap,
                    approx_sigmoid, use_buffered, weight_bufs):
    """Large-dim_h fallback: one pallas_call per layer so only one weight matrix
    is resident at a time (needed when the fused kernel would not fit VMEM,
    e.g. big dim_h on v7x's 64 MiB per-TC VMEM)."""
    # TODO(synk): if a single (dim_h x dim_h) weight ever exceeds the per-layer VMEM
    # budget, stream its K-chunks with pltpu.emit_pipeline instead of keeping it resident.
    compute_bytes = jnp.dtype(compute_dtype).itemsize
    h = z_p
    n_layers = len(padded)
    for li, (W_p, b_p) in enumerate(padded):
        pi, po = pdims[li], pdims[li + 1]
        last = li == n_layers - 1
        o_dtype = out_dtype if last else compute_dtype
        o_bytes = jnp.dtype(o_dtype).itemsize
        kernel = _make_layer_kernel("sigmoid" if last else "relu", approx_sigmoid)
        vmem_limit = min(cap, _layer_vmem_estimate(pi, po, tb, compute_bytes,
                                                   o_bytes, weight_bufs))
        h = pl.pallas_call(
            kernel,
            out_shape=jax.ShapeDtypeStruct((B_pad, po), o_dtype),
            grid_spec=pl.GridSpec(
                grid=(B_pad // tb,),
                in_specs=[pl.BlockSpec((tb, pi), lambda i: (i, 0)),
                          _resident_spec((pi, po), use_buffered),
                          _resident_spec((1, po), use_buffered)],
                out_specs=pl.BlockSpec((tb, po), lambda i: (i, 0)),
            ),
            compiler_params=pltpu.CompilerParams(
                dimension_semantics=("parallel",),
                vmem_limit_bytes=int(vmem_limit),
            ),
        )(h, W_p, b_p)
    return h


# ----------------------------------------------------------------------------
# Public forward
# ----------------------------------------------------------------------------

def decoder_forward(z, params, *, tb=None, compute_dtype=jnp.bfloat16,
                    out_dtype=jnp.float32, force_per_layer=False):
    """z: (B, n_z). params: list of 5 tuples
    (W_mu, W_logsigma, eps_W, b_mu, b_logsigma, eps_b), biases shaped (1, d_out).

    compute_dtype: dtype of the MXU operands and of the streamed z / intermediate
    activations (bf16 by default; f32 for bit-accurate checking — note bf16 weights
    round to ~3 significant digits, which can be comparable to the Bayesian noise
    with very small sigma_prior).  Accumulation / bias / activations are always f32.
    out_dtype: dtype of the returned output (f32 by default; bf16 halves writeback).
    """
    B, n_z = z.shape

    # --- 1) Hoist the Bayesian reparameterization out of the kernel (done once) ---
    eff = []
    for wm, ws, ew, bm, bs, eb in params:
        W = wm + jax.nn.softplus(ws) * ew          # overflow-safe log(1 + exp(.))
        b = bm + jax.nn.softplus(bs) * eb
        eff.append((W, b))

    dims = [eff[0][0].shape[0]] + [W.shape[1] for W, _ in eff]   # [n_z, h, h, h, h, n_out]
    pdims = [_round_up(d, _LANE) for d in dims]                  # lane-dense feature dims
    n_out = dims[-1]

    compute_bytes = jnp.dtype(compute_dtype).itemsize
    out_bytes = jnp.dtype(out_dtype).itemsize
    vmem_capacity, num_cores = _chip_info()
    cap = _vmem_cap(vmem_capacity)

    # --- 2) Chip-aware batch tile: split only for megacore on 2-TC chips (v7x);
    #        single-TC v5e/v6e run the largest tile that fits. ---
    if tb is None:
        if num_cores >= 2 and B > _SUBLANE:
            tb = min(512, _round_up(-(-B // num_cores), _SUBLANE))
        else:
            tb = min(1024, _round_up(B, _SUBLANE))
    tb = max(_SUBLANE, _round_up(tb, _SUBLANE))
    # Shrink the tile if the streamed slabs would blow the VMEM budget.
    while tb > _SUBLANE and _fused_vmem_estimate(
            pdims, tb, compute_bytes, out_bytes, 1) > cap:
        tb = _round_up(tb // 2, _SUBLANE)
    B_pad = _round_up(B, tb)

    # --- 3) Zero-pad z and parameters to lane-dense shapes.  z is stored in
    #        compute_dtype so the only per-step HBM->VMEM stream is half width.
    #        (Padding is inert: padded columns stay zero through every layer and
    #        padded output rows/cols are sliced off below.) ---
    z_p = jnp.zeros((B_pad, pdims[0]), compute_dtype).at[:B, :n_z].set(
        z.astype(compute_dtype))
    padded = []
    for li, (W, b) in enumerate(eff):
        d_in, d_out = W.shape
        pi, po = pdims[li], pdims[li + 1]
        W_p = jnp.zeros((pi, po), compute_dtype).at[:d_in, :d_out].set(
            W.astype(compute_dtype))
        b_p = jnp.zeros((1, po), jnp.float32).at[:, :d_out].set(
            b.astype(jnp.float32))
        padded.append((W_p, b_p))

    approx_sigmoid = jnp.dtype(compute_dtype) != jnp.dtype(jnp.float32)
    fused_fits = _fused_vmem_estimate(pdims, tb, compute_bytes, out_bytes, 1) <= cap
    use_per_layer = force_per_layer or not fused_fits

    def run(use_buffered):
        weight_bufs = 1 if use_buffered else 2
        if use_per_layer:
            return _per_layer_call(z_p, padded, pdims, tb, B_pad, compute_dtype,
                                   out_dtype, cap, approx_sigmoid,
                                   use_buffered, weight_bufs)
        return _fused_call(z_p, padded, pdims, tb, B_pad, compute_dtype, out_dtype,
                           cap, compute_bytes, out_bytes, approx_sigmoid,
                           use_buffered, weight_bufs)

    try:
        out_p = run(use_buffered=True)
    except Exception:
        # Defensive fallback: if this Pallas build rejects pipeline_mode=pl.Buffered(1)
        # on grid-invariant blocks, retry with default double buffering.
        out_p = run(use_buffered=False)

    # NOTE: padded output columns hold sigmoid(0)=0.5; they (and padded batch rows)
    # are discarded here — never consume out_p directly.
    return out_p[:B, :n_out]


# ----------------------------------------------------------------------------
# Reference + init + test
# ----------------------------------------------------------------------------

def decoder_reference(z, params):
    """Pure-JAX reference with the original module's semantics."""
    h = z
    for li, (wm, ws, ew, bm, bs, eb) in enumerate(params):
        W = wm + jax.nn.softplus(ws) * ew
        b = bm + jax.nn.softplus(bs) * eb
        h = h @ W + b
        h = jax.nn.sigmoid(h) if li == len(params) - 1 else jnp.maximum(h, 0.0)
    return h


def init_params(key, n_z, dim_h, n_input, sigma_prior):
    dims = [(n_z, dim_h), (dim_h, dim_h), (dim_h, dim_h), (dim_h, dim_h), (dim_h, n_input)]
    params = []
    for (d_in, d_out) in dims:
        key, k1, k2, k3, k4, k5, k6 = jax.random.split(key, 7)
        W_mu = 0.01 * jax.random.normal(k1, (d_in, d_out), jnp.float32)
        W_logsigma = 0.01 * jax.random.normal(k2, (d_in, d_out), jnp.float32)
        b_mu = jax.random.uniform(k3, (1, d_out), jnp.float32, -0.01, 0.01)
        b_logsigma = jax.random.uniform(k4, (1, d_out), jnp.float32, -0.01, 0.01)
        eps_W = sigma_prior * jax.random.normal(k5, (d_in, d_out), jnp.float32)
        eps_b = sigma_prior * jax.random.normal(k6, (1, d_out), jnp.float32)
        params.append((W_mu, W_logsigma, eps_W, b_mu, b_logsigma, eps_b))
    return params


if __name__ == "__main__":
    # Small shapes consistent with the module: args.n_z, args.dim_h, args.n_input.
    B, n_z, dim_h, n_input = 16, 8, 32, 64
    sigma_prior = 0.1

    key = jax.random.PRNGKey(0)
    kz, kp = jax.random.split(key)
    z = jax.random.normal(kz, (B, n_z), jnp.float32)
    params = init_params(kp, n_z, dim_h, n_input, sigma_prior)

    ref = decoder_reference(z, params)

    # 1) Strict check of the fused kernel with f32 MXU operands (exact sigmoid).
    out_f32 = jax.block_until_ready(decoder_forward(z, params, compute_dtype=jnp.float32))
    assert out_f32.shape == (B, n_input)
    assert jnp.allclose(out_f32, ref, atol=1e-5, rtol=1e-5)

    # 2) Performance-default path: bf16 operands / streams, f32 accumulation.
    out_bf16 = jax.block_until_ready(decoder_forward(z, params))
    assert out_bf16.shape == (B, n_input)
    assert jnp.allclose(out_bf16, ref, atol=1e-2)

    # 3) Exercise the large-dim_h fallback path (per-layer pallas_calls).
    out_pl = jax.block_until_ready(decoder_forward(z, params, force_per_layer=True))
    assert out_pl.shape == (B, n_input)
    assert jnp.allclose(out_pl, ref, atol=1e-2)

    print("KERNEL_OK")
</pallas_src>

<mosaic_0001>
module attributes {stable_mosaic.version = 11 : i64} {
  func.func @kernel(%arg0: i32, %arg1: memref<16x128xf32, #tpu.memory_space<vmem>>, %arg2: memref<128x128xf32, #tpu.memory_space<vmem>>, %arg3: memref<1x128xf32, #tpu.memory_space<vmem>>, %arg4: memref<128x128xf32, #tpu.memory_space<vmem>>, %arg5: memref<1x128xf32, #tpu.memory_space<vmem>>, %arg6: memref<128x128xf32, #tpu.memory_space<vmem>>, %arg7: memref<1x128xf32, #tpu.memory_space<vmem>>, %arg8: memref<128x128xf32, #tpu.memory_space<vmem>>, %arg9: memref<1x128xf32, #tpu.memory_space<vmem>>, %arg10: memref<128x128xf32, #tpu.memory_space<vmem>>, %arg11: memref<1x128xf32, #tpu.memory_space<vmem>>, %arg12: memref<16x128xf32, #tpu.memory_space<vmem>>) attributes {dimension_semantics = [#tpu.dimension_semantics<parallel>], iteration_bounds = array<i64: 1>, scalar_prefetch = 0 : i64, scratch_operands = 0 : i64, tpu.core_type = #tpu.core_type<tc>, window_params = [{transform_indices = @transform_0, window_bounds = array<i64: 16, 128>}, {pipeline_mode = #tpu.pipeline_mode<synchronous>, transform_indices = @transform_1, window_bounds = array<i64: 128, 128>}, {pipeline_mode = #tpu.pipeline_mode<synchronous>, transform_indices = @transform_2, window_bounds = array<i64: 1, 128>}, {pipeline_mode = #tpu.pipeline_mode<synchronous>, transform_indices = @transform_3, window_bounds = array<i64: 128, 128>}, {pipeline_mode = #tpu.pipeline_mode<synchronous>, transform_indices = @transform_4, window_bounds = array<i64: 1, 128>}, {pipeline_mode = #tpu.pipeline_mode<synchronous>, transform_indices = @transform_5, window_bounds = array<i64: 128, 128>}, {pipeline_mode = #tpu.pipeline_mode<synchronous>, transform_indices = @transform_6, window_bounds = array<i64: 1, 128>}, {pipeline_mode = #tpu.pipeline_mode<synchronous>, transform_indices = @transform_7, window_bounds = array<i64: 128, 128>}, {pipeline_mode = #tpu.pipeline_mode<synchronous>, transform_indices = @transform_8, window_bounds = array<i64: 1, 128>}, {pipeline_mode = #tpu.pipeline_mode<synchronous>, transform_indices = @transform_9, window_bounds = array<i64: 128, 128>}, {pipeline_mode = #tpu.pipeline_mode<synchronous>, transform_indices = @transform_10, window_bounds = array<i64: 1, 128>}, {transform_indices = @transform_11, window_bounds = array<i64: 16, 128>}]} {
    %c0 = arith.constant 0 : index
    %c0_0 = arith.constant 0 : index
    %0 = vector.load %arg1[%c0, %c0_0] : memref<16x128xf32, #tpu.memory_space<vmem>>, vector<16x128xf32>
    %c0_1 = arith.constant 0 : index
    %c0_2 = arith.constant 0 : index
    %1 = vector.load %arg2[%c0_1, %c0_2] : memref<128x128xf32, #tpu.memory_space<vmem>>, vector<128x128xf32>
    %cst = arith.constant dense<0.000000e+00> : vector<16x128xf32>
    %2 = tpu.matmul %0, %1, %cst {dimension_numbers = #tpu.dot_dimension_numbers<[1], [0], [0], [1], [0, 0, 1, 1], [], []>} : vector<16x128xf32>, vector<128x128xf32>, vector<16x128xf32> -> vector<16x128xf32>
    %c0_3 = arith.constant 0 : index
    %c0_4 = arith.constant 0 : index
    %3 = vector.load %arg3[%c0_3, %c0_4] : memref<1x128xf32, #tpu.memory_space<vmem>>, vector<1x128xf32>
    %4 = vector.broadcast %3 : vector<1x128xf32> to vector<16x128xf32>
    %5 = arith.addf %2, %4 : vector<16x128xf32>
    %cst_5 = arith.constant 0.000000e+00 : f32
    %6 = vector.broadcast %cst_5 : f32 to vector<16x128xf32>
    %7 = arith.maximumf %5, %6 : vector<16x128xf32>
    %c0_6 = arith.constant 0 : index
    %c0_7 = arith.constant 0 : index
    %8 = vector.load %arg4[%c0_6, %c0_7] : memref<128x128xf32, #tpu.memory_space<vmem>>, vector<128x128xf32>
    %cst_8 = arith.constant dense<0.000000e+00> : vector<16x128xf32>
    %9 = tpu.matmul %7, %8, %cst_8 {dimension_numbers = #tpu.dot_dimension_numbers<[1], [0], [0], [1], [0, 0, 1, 1], [], []>} : vector<16x128xf32>, vector<128x128xf32>, vector<16x128xf32> -> vector<16x128xf32>
    %c0_9 = arith.constant 0 : index
    %c0_10 = arith.constant 0 : index
    %10 = vector.load %arg5[%c0_9, %c0_10] : memref<1x128xf32, #tpu.memory_space<vmem>>, vector<1x128xf32>
    %11 = vector.broadcast %10 : vector<1x128xf32> to vector<16x128xf32>
    %12 = arith.addf %9, %11 : vector<16x128xf32>
    %cst_11 = arith.constant 0.000000e+00 : f32
    %13 = vector.broadcast %cst_11 : f32 to vector<16x128xf32>
    %14 = arith.maximumf %12, %13 : vector<16x128xf32>
    %c0_12 = arith.constant 0 : index
    %c0_13 = arith.constant 0 : index
    %15 = vector.load %arg6[%c0_12, %c0_13] : memref<128x128xf32, #tpu.memory_space<vmem>>, vector<128x128xf32>
    %cst_14 = arith.constant dense<0.000000e+00> : vector<16x128xf32>
    %16 = tpu.matmul %14, %15, %cst_14 {dimension_numbers = #tpu.dot_dimension_numbers<[1], [0], [0], [1], [0, 0, 1, 1], [], []>} : vector<16x128xf32>, vector<128x128xf32>, vector<16x128xf32> -> vector<16x128xf32>
    %c0_15 = arith.constant 0 : index
    %c0_16 = arith.constant 0 : index
    %17 = vector.load %arg7[%c0_15, %c0_16] : memref<1x128xf32, #tpu.memory_space<vmem>>, vector<1x128xf32>
    %18 = vector.broadcast %17 : vector<1x128xf32> to vector<16x128xf32>
    %19 = arith.addf %16, %18 : vector<16x128xf32>
    %cst_17 = arith.constant 0.000000e+00 : f32
    %20 = vector.broadcast %cst_17 : f32 to vector<16x128xf32>
    %21 = arith.maximumf %19, %20 : vector<16x128xf32>
    %c0_18 = arith.constant 0 : index
    %c0_19 = arith.constant 0 : index
    %22 = vector.load %arg8[%c0_18, %c0_19] : memref<128x128xf32, #tpu.memory_space<vmem>>, vector<128x128xf32>
    %cst_20 = arith.constant dense<0.000000e+00> : vector<16x128xf32>
    %23 = tpu.matmul %21, %22, %cst_20 {dimension_numbers = #tpu.dot_dimension_numbers<[1], [0], [0], [1], [0, 0, 1, 1], [], []>} : vector<16x128xf32>, vector<128x128xf32>, vector<16x128xf32> -> vector<16x128xf32>
    %c0_21 = arith.constant 0 : index
    %c0_22 = arith.constant 0 : index
    %24 = vector.load %arg9[%c0_21, %c0_22] : memref<1x128xf32, #tpu.memory_space<vmem>>, vector<1x128xf32>
    %25 = vector.broadcast %24 : vector<1x128xf32> to vector<16x128xf32>
    %26 = arith.addf %23, %25 : vector<16x128xf32>
    %cst_23 = arith.constant 0.000000e+00 : f32
    %27 = vector.broadcast %cst_23 : f32 to vector<16x128xf32>
    %28 = arith.maximumf %26, %27 : vector<16x128xf32>
    %c0_24 = arith.constant 0 : index
    %c0_25 = arith.constant 0 : index
    %29 = vector.load %arg10[%c0_24, %c0_25] : memref<128x128xf32, #tpu.memory_space<vmem>>, vector<128x128xf32>
    %cst_26 = arith.constant dense<0.000000e+00> : vector<16x128xf32>
    %30 = tpu.matmul %28, %29, %cst_26 {dimension_numbers = #tpu.dot_dimension_numbers<[1], [0], [0], [1], [0, 0, 1, 1], [], []>} : vector<16x128xf32>, vector<128x128xf32>, vector<16x128xf32> -> vector<16x128xf32>
    %c0_27 = arith.constant 0 : index
    %c0_28 = arith.constant 0 : index
    %31 = vector.load %arg11[%c0_27, %c0_28] : memref<1x128xf32, #tpu.memory_space<vmem>>, vector<1x128xf32>
    %32 = vector.broadcast %31 : vector<1x128xf32> to vector<16x128xf32>
    %33 = arith.addf %30, %32 : vector<16x128xf32>
    %34 = arith.negf %33 : vector<16x128xf32>
    %35 = math.exp %34 : vector<16x128xf32>
    %cst_29 = arith.constant 1.000000e+00 : f32
    %36 = vector.broadcast %cst_29 : f32 to vector<16x128xf32>
    %37 = arith.addf %36, %35 : vector<16x128xf32>
    %38 = arith.divf %36, %37 : vector<16x128xf32>
    %c0_30 = arith.constant 0 : index
    %c0_31 = arith.constant 0 : index
    %39 = vector.load %arg12[%c0_30, %c0_31] : memref<16x128xf32, #tpu.memory_space<vmem>>, vector<16x128xf32>
    tpu.vector_store %arg12[%c0_30, %c0_31], %38 {strides = array<i32>} : memref<16x128xf32, #tpu.memory_space<vmem>>, vector<16x128xf32>,
    return
  }
  func.func @transform_0(%arg0: i32) -> (i32, i32) {
    %c0_i32 = arith.constant 0 : i32
    %c0_i32_0 = arith.constant 0 : i32
    return %arg0, %c0_i32 : i32, i32
  }
  func.func @transform_1(%arg0: i32) -> (i32, i32) {
    %c0_i32 = arith.constant 0 : i32
    %c0_i32_0 = arith.constant 0 : i32
    %c0_i32_1 = arith.constant 0 : i32
    return %c0_i32, %c0_i32_0 : i32, i32
  }
  func.func @transform_2(%arg0: i32) -> (i32, i32) {
    %c0_i32 = arith.constant 0 : i32
    %c0_i32_0 = arith.constant 0 : i32
    %c0_i32_1 = arith.constant 0 : i32
    return %c0_i32, %c0_i32_0 : i32, i32
  }
  func.func @transform_3(%arg0: i32) -> (i32, i32) {
    %c0_i32 = arith.constant 0 : i32
    %c0_i32_0 = arith.constant 0 : i32
    %c0_i32_1 = arith.constant 0 : i32
    return %c0_i32, %c0_i32_0 : i32, i32
  }
  func.func @transform_4(%arg0: i32) -> (i32, i32) {
    %c0_i32 = arith.constant 0 : i32
    %c0_i32_0 = arith.constant 0 : i32
    %c0_i32_1 = arith.constant 0 : i32
    return %c0_i32, %c0_i32_0 : i32, i32
  }
  func.func @transform_5(%arg0: i32) -> (i32, i32) {
    %c0_i32 = arith.constant 0 : i32
    %c0_i32_0 = arith.constant 0 : i32
    %c0_i32_1 = arith.constant 0 : i32
    return %c0_i32, %c0_i32_0 : i32, i32
  }
  func.func @transform_6(%arg0: i32) -> (i32, i32) {
    %c0_i32 = arith.constant 0 : i32
    %c0_i32_0 = arith.constant 0 : i32
    %c0_i32_1 = arith.constant 0 : i32
    return %c0_i32, %c0_i32_0 : i32, i32
  }
  func.func @transform_7(%arg0: i32) -> (i32, i32) {
    %c0_i32 = arith.constant 0 : i32
    %c0_i32_0 = arith.constant 0 : i32
    %c0_i32_1 = arith.constant 0 : i32
    return %c0_i32, %c0_i32_0 : i32, i32
  }
  func.func @transform_8(%arg0: i32) -> (i32, i32) {
    %c0_i32 = arith.constant 0 : i32
    %c0_i32_0 = arith.constant 0 : i32
    %c0_i32_1 = arith.constant 0 : i32
    return %c0_i32, %c0_i32_0 : i32, i32
  }
  func.func @transform_9(%arg0: i32) -> (i32, i32) {
    %c0_i32 = arith.constant 0 : i32
    %c0_i32_0 = arith.constant 0 : i32
    %c0_i32_1 = arith.constant 0 : i32
    return %c0_i32, %c0_i32_0 : i32, i32
  }
  func.func @transform_10(%arg0: i32) -> (i32, i32) {
    %c0_i32 = arith.constant 0 : i32
    %c0_i32_0 = arith.constant 0 : i32
    %c0_i32_1 = arith.constant 0 : i32
    return %c0_i32, %c0_i32_0 : i32, i32
  }
  func.func @transform_11(%arg0: i32) -> (i32, i32) {
    %c0_i32 = arith.constant 0 : i32
    %c0_i32_0 = arith.constant 0 : i32
    return %arg0, %c0_i32 : i32, i32
  }
}

module attributes {stable_mosaic.version = 11 : i64} {
  func.func @kernel(%arg0: i32, %arg1: memref<16x128xf32, #tpu.memory_space<vmem>>, %arg2: memref<128x128xf32, #tpu.memory_space<vmem>>, %arg3: memref<1x128xf32, #tpu.memory_space<vmem>>, %arg4: memref<128x128xf32, #tpu.memory_space<vmem>>, %arg5: memref<1x128xf32, #tpu.memory_space<vmem>>, %arg6: memref<128x128xf32, #tpu.memory_space<vmem>>, %arg7: memref<1x128xf32, #tpu.memory_space<vmem>>, %arg8: memref<128x128xf32, #tpu.memory_space<vmem>>, %arg9: memref<1x128xf32, #tpu.memory_space<vmem>>, %arg10: memref<128x128xf32, #tpu.memory_space<vmem>>, %arg11: memref<1x128xf32, #tpu.memory_space<vmem>>, %arg12: memref<16x128xf32, #tpu.memory_space<vmem>>) attributes {dimension_semantics = [#tpu.dimension_semantics<parallel>], iteration_bounds = array<i64: 1>, scalar_prefetch = 0 : i64, scratch_operands = 0 : i64, tpu.core_type = #tpu.core_type<tc>, window_params = [{transform_indices = @transform_0, window_bounds = array<i64: 16, 128>}, {pipeline_mode = #tpu.pipeline_mode<synchronous>, transform_indices = @transform_1, window_bounds = array<i64: 128, 128>}, {pipeline_mode = #tpu.pipeline_mode<synchronous>, transform_indices = @transform_2, window_bounds = array<i64: 1, 128>}, {pipeline_mode = #tpu.pipeline_mode<synchronous>, transform_indices = @transform_3, window_bounds = array<i64: 128, 128>}, {pipeline_mode = #tpu.pipeline_mode<synchronous>, transform_indices = @transform_4, window_bounds = array<i64: 1, 128>}, {pipeline_mode = #tpu.pipeline_mode<synchronous>, transform_indices = @transform_5, window_bounds = array<i64: 128, 128>}, {pipeline_mode = #tpu.pipeline_mode<synchronous>, transform_indices = @transform_6, window_bounds = array<i64: 1, 128>}, {pipeline_mode = #tpu.pipeline_mode<synchronous>, transform_indices = @transform_7, window_bounds = array<i64: 128, 128>}, {pipeline_mode = #tpu.pipeline_mode<synchronous>, transform_indices = @transform_8, window_bounds = array<i64: 1, 128>}, {pipeline_mode = #tpu.pipeline_mode<synchronous>, transform_indices = @transform_9, window_bounds = array<i64: 128, 128>}, {pipeline_mode = #tpu.pipeline_mode<synchronous>, transform_indices = @transform_10, window_bounds = array<i64: 1, 128>}, {transform_indices = @transform_11, window_bounds = array<i64: 16, 128>}]} {
    %c0 = arith.constant 0 : index
    %c0_0 = arith.constant 0 : index
    %0 = vector.load %arg1[%c0, %c0_0] : memref<16x128xf32, #tpu.memory_space<vmem>>, vector<16x128xf32>
    %c0_1 = arith.constant 0 : index
    %c0_2 = arith.constant 0 : index
    %1 = vector.load %arg2[%c0_1, %c0_2] : memref<128x128xf32, #tpu.memory_space<vmem>>, vector<128x128xf32>
    %cst = arith.constant dense<0.000000e+00> : vector<16x128xf32>
    %2 = tpu.matmul %0, %1, %cst {dimension_numbers = #tpu.dot_dimension_numbers<[1], [0], [0], [1], [0, 0, 1, 1], [], []>} : vector<16x128xf32>, vector<128x128xf32>, vector<16x128xf32> -> vector<16x128xf32>
    %c0_3 = arith.constant 0 : index
    %c0_4 = arith.constant 0 : index
    %3 = vector.load %arg3[%c0_3, %c0_4] : memref<1x128xf32, #tpu.memory_space<vmem>>, vector<1x128xf32>
    %4 = vector.broadcast %3 : vector<1x128xf32> to vector<16x128xf32>
    %5 = arith.addf %2, %4 : vector<16x128xf32>
    %cst_5 = arith.constant 0.000000e+00 : f32
    %6 = vector.broadcast %cst_5 : f32 to vector<16x128xf32>
    %7 = arith.maximumf %5, %6 : vector<16x128xf32>
    %c0_6 = arith.constant 0 : index
    %c0_7 = arith.constant 0 : index
    %8 = vector.load %arg4[%c0_6, %c0_7] : memref<128x128xf32, #tpu.memory_space<vmem>>, vector<128x128xf32>
    %cst_8 = arith.constant dense<0.000000e+00> : vector<16x128xf32>
    %9 = tpu.matmul %7, %8, %cst_8 {dimension_numbers = #tpu.dot_dimension_numbers<[1], [0], [0], [1], [0, 0, 1, 1], [], []>} : vector<16x128xf32>, vector<128x128xf32>, vector<16x128xf32> -> vector<16x128xf32>
    %c0_9 = arith.constant 0 : index
    %c0_10 = arith.constant 0 : index
    %10 = vector.load %arg5[%c0_9, %c0_10] : memref<1x128xf32, #tpu.memory_space<vmem>>, vector<1x128xf32>
    %11 = vector.broadcast %10 : vector<1x128xf32> to vector<16x128xf32>
    %12 = arith.addf %9, %11 : vector<16x128xf32>
    %cst_11 = arith.constant 0.000000e+00 : f32
    %13 = vector.broadcast %cst_11 : f32 to vector<16x128xf32>
    %14 = arith.maximumf %12, %13 : vector<16x128xf32>
    %c0_12 = arith.constant 0 : index
    %c0_13 = arith.constant 0 : index
    %15 = vector.load %arg6[%c0_12, %c0_13] : memref<128x128xf32, #tpu.memory_space<vmem>>, vector<128x128xf32>
    %cst_14 = arith.constant dense<0.000000e+00> : vector<16x128xf32>
    %16 = tpu.matmul %14, %15, %cst_14 {dimension_numbers = #tpu.dot_dimension_numbers<[1], [0], [0], [1], [0, 0, 1, 1], [], []>} : vector<16x128xf32>, vector<128x128xf32>, vector<16x128xf32> -> vector<16x128xf32>
    %c0_15 = arith.constant 0 : index
    %c0_16 = arith.constant 0 : index
    %17 = vector.load %arg7[%c0_15, %c0_16] : memref<1x128xf32, #tpu.memory_space<vmem>>, vector<1x128xf32>
    %18 = vector.broadcast %17 : vector<1x128xf32> to vector<16x128xf32>
    %19 = arith.addf %16, %18 : vector<16x128xf32>
    %cst_17 = arith.constant 0.000000e+00 : f32
    %20 = vector.broadcast %cst_17 : f32 to vector<16x128xf32>
    %21 = arith.maximumf %19, %20 : vector<16x128xf32>
    %c0_18 = arith.constant 0 : index
    %c0_19 = arith.constant 0 : index
    %22 = vector.load %arg8[%c0_18, %c0_19] : memref<128x128xf32, #tpu.memory_space<vmem>>, vector<128x128xf32>
    %cst_20 = arith.constant dense<0.000000e+00> : vector<16x128xf32>
    %23 = tpu.matmul %21, %22, %cst_20 {dimension_numbers = #tpu.dot_dimension_numbers<[1], [0], [0], [1], [0, 0, 1, 1], [], []>} : vector<16x128xf32>, vector<128x128xf32>, vector<16x128xf32> -> vector<16x128xf32>
    %c0_21 = arith.constant 0 : index
    %c0_22 = arith.constant 0 : index
    %24 = vector.load %arg9[%c0_21, %c0_22] : memref<1x128xf32, #tpu.memory_space<vmem>>, vector<1x128xf32>
    %25 = vector.broadcast %24 : vector<1x128xf32> to vector<16x128xf32>
    %26 = arith.addf %23, %25 : vector<16x128xf32>
    %cst_23 = arith.constant 0.000000e+00 : f32
    %27 = vector.broadcast %cst_23 : f32 to vector<16x128xf32>
    %28 = arith.maximumf %26, %27 : vector<16x128xf32>
    %c0_24 = arith.constant 0 : index
    %c0_25 = arith.constant 0 : index
    %29 = vector.load %arg10[%c0_24, %c0_25] : memref<128x128xf32, #tpu.memory_space<vmem>>, vector<128x128xf32>
    %cst_26 = arith.constant dense<0.000000e+00> : vector<16x128xf32>
    %30 = tpu.matmul %28, %29, %cst_26 {dimension_numbers = #tpu.dot_dimension_numbers<[1], [0], [0], [1], [0, 0, 1, 1], [], []>} : vector<16x128xf32>, vector<128x128xf32>, vector<16x128xf32> -> vector<16x128xf32>
    %c0_27 = arith.constant 0 : index
    %c0_28 = arith.constant 0 : index
    %31 = vector.load %arg11[%c0_27, %c0_28] : memref<1x128xf32, #tpu.memory_space<vmem>>, vector<1x128xf32>
    %32 = vector.broadcast %31 : vector<1x128xf32> to vector<16x128xf32>
    %33 = arith.addf %30, %32 : vector<16x128xf32>
    %34 = arith.negf %33 : vector<16x128xf32>
    %35 = math.exp %34 : vector<16x128xf32>
    %cst_29 = arith.constant 1.000000e+00 : f32
    %36 = vector.broadcast %cst_29 : f32 to vector<16x128xf32>
    %37 = arith.addf %36, %35 : vector<16x128xf32>
    %38 = arith.divf %36, %37 : vector<16x128xf32>
    %c0_30 = arith.constant 0 : index
    %c0_31 = arith.constant 0 : index
    %39 = vector.load %arg12[%c0_30, %c0_31] : memref<16x128xf32, #tpu.memory_space<vmem>>, vector<16x128xf32>
    tpu.vector_store %arg12[%c0_30, %c0_31], %38 {strides = array<i32>} : memref<16x128xf32, #tpu.memory_space<vmem>>, vector<16x128xf32>,
    return
  }
  func.func @transform_0(%arg0: i32) -> (i32, i32) {
    %c0_i32 = arith.constant 0 : i32
    %c0_i32_0 = arith.constant 0 : i32
    return %arg0, %c0_i32 : i32, i32
  }
  func.func @transform_1(%arg0: i32) -> (i32, i32) {
    %c0_i32 = arith.constant 0 : i32
    %c0_i32_0 = arith.constant 0 : i32
    %c0_i32_1 = arith.constant 0 : i32
    return %c0_i32, %c0_i32_0 : i32, i32
  }
  func.func @transform_2(%arg0: i32) -> (i32, i32) {
    %c0_i32 = arith.constant 0 : i32
    %c0_i32_0 = arith.constant 0 : i32
    %c0_i32_1 = arith.constant 0 : i32
    return %c0_i32, %c0_i32_0 : i32, i32
  }
  func.func @transform_3(%arg0: i32) -> (i32, i32) {
    %c0_i32 = arith.constant 0 : i32
    %c0_i32_0 = arith.constant 0 : i32
    %c0_i32_1 = arith.constant 0 : i32
    return %c0_i32, %c0_i32_0 : i32, i32
  }
  func.func @transform_4(%arg0: i32) -> (i32, i32) {
    %c0_i32 = arith.constant 0 : i32
    %c0_i32_0 = arith.constant 0 : i32
    %c0_i32_1 = arith.constant 0 : i32
    return %c0_i32, %c0_i32_0 : i32, i32
  }
  func.func @transform_5(%arg0: i32) -> (i32, i32) {
    %c0_i32 = arith.constant 0 : i32
    %c0_i32_0 = arith.constant 0 : i32
    %c0_i32_1 = arith.constant 0 : i32
    return %c0_i32, %c0_i32_0 : i32, i32
  }
  func.func @transform_6(%arg0: i32) -> (i32, i32) {
    %c0_i32 = arith.constant 0 : i32
    %c0_i32_0 = arith.constant 0 : i32
    %c0_i32_1 = arith.constant 0 : i32
    return %c0_i32, %c0_i32_0 : i32, i32
  }
  func.func @transform_7(%arg0: i32) -> (i32, i32) {
    %c0_i32 = arith.constant 0 : i32
    %c0_i32_0 = arith.constant 0 : i32
    %c0_i32_1 = arith.constant 0 : i32
    return %c0_i32, %c0_i32_0 : i32, i32
  }
  func.func @transform_8(%arg0: i32) -> (i32, i32) {
    %c0_i32 = arith.constant 0 : i32
    %c0_i32_0 = arith.constant 0 : i32
    %c0_i32_1 = arith.constant 0 : i32
    return %c0_i32, %c0_i32_0 : i32, i32
  }
  func.func @transform_9(%arg0: i32) -> (i32, i32) {
    %c0_i32 = arith.constant 0 : i32
    %c0_i32_0 = arith.constant 0 : i32
    %c0_i32_1 = arith.constant 0 : i32
    return %c0_i32, %c0_i32_0 : i32, i32
  }
  func.func @transform_10(%arg0: i32) -> (i32, i32) {
    %c0_i32 = arith.constant 0 : i32
    %c0_i32_0 = arith.constant 0 : i32
    %c0_i32_1 = arith.constant 0 : i32
    return %c0_i32, %c0_i32_0 : i32, i32
  }
  func.func @transform_11(%arg0: i32) -> (i32, i32) {
    %c0_i32 = arith.constant 0 : i32
    %c0_i32_0 = arith.constant 0 : i32
    return %arg0, %c0_i32 : i32, i32
  }
}

</mosaic_0001>

<llo_original>
// kernel: tpu_custom_call.1
$region0: #{tpu_custom_call.1}
  #allocation0 [shape = 'u32[]', space=smem, size = 0x4, offset = 0x4, fixed_abs, tag = 'smem constant byte address 0x4 - core index']
  #allocation1 [shape = 'u32[72,128]{1,0:T(1,128)}', space=vmem, size = 0x9000, scoped, tag = 'internal scratch']
  %s0 = inlined_call_operand.hbm [shape: f32[16,128], index: 0, kind: input, shape index: {}]
  %s1 = inlined_call_operand.hbm [shape: f32[128,128], index: 1, kind: input, shape index: {}]
  %s2 = inlined_call_operand.vmem [shape: f32[1,128], index: 2, kind: input, shape index: {}]
  %s3 = inlined_call_operand.hbm [shape: f32[128,128], index: 3, kind: input, shape index: {}]
  %s4 = inlined_call_operand.vmem [shape: f32[1,128], index: 4, kind: input, shape index: {}]
  %s5 = inlined_call_operand.hbm [shape: f32[128,128], index: 5, kind: input, shape index: {}]
  %s6 = inlined_call_operand.vmem [shape: f32[1,128], index: 6, kind: input, shape index: {}]
  %s7 = inlined_call_operand.hbm [shape: f32[128,128], index: 7, kind: input, shape index: {}]
  %s8 = inlined_call_operand.vmem [shape: f32[1,128], index: 8, kind: input, shape index: {}]
  %s9 = inlined_call_operand.hbm [shape: f32[128,128], index: 9, kind: input, shape index: {}]
  %s10 = inlined_call_operand.vmem [shape: f32[1,128], index: 10, kind: input, shape index: {}]
  %s11 = inlined_call_operand.hbm [shape: f32[16,128], index: 11, kind: output, shape index: {}]
  %s12 = sld [smem:[#allocation0]]
  $region78: #{tpu_custom_call.1} parent=0
    _
  %s14 = ssub.s32 1, %s12
  %s15 = scalar_select 0, %s14, %s12
  $region1: #{tpu_custom_call.1} parent=0
    #allocation2 [shape = 'u8[8192]{0}', space=vmem, size = 0x2000, scoped, tag = 'input window, operand 0, single buffered']
    #allocation3 [shape = 's32[1]{0}', space=sflag, size = 0x4, scoped, tag = 'scoped memory for tpu_custom_call.1']
    #allocation4 [shape = 's32[1]{0}', space=sflag, size = 0x4, scoped, tag = 'scoped memory for tpu_custom_call.1']
    #allocation5 [shape = 'u8[65536]{0}', space=vmem, size = 0x10000, scoped, tag = 'input window, operand 1, single buffered']
    #allocation6 [shape = 's32[1]{0}', space=sflag, size = 0x4, scoped, tag = 'scoped memory for tpu_custom_call.1']
    #allocation7 [shape = 'u8[65536]{0}', space=vmem, size = 0x10000, scoped, tag = 'input window, operand 3, single buffered']
    #allocation8 [shape = 'u8[65536]{0}', space=vmem, size = 0x10000, scoped, tag = 'input window, operand 5, single buffered']
    #allocation9 [shape = 's32[1]{0}', space=sflag, size = 0x4, scoped, tag = 'scoped memory for tpu_custom_call.1']
    #allocation10 [shape = 'u8[65536]{0}', space=vmem, size = 0x10000, scoped, tag = 'input window, operand 7, single buffered']
    #allocation11 [shape = 'u8[65536]{0}', space=vmem, size = 0x10000, scoped, tag = 'input window, operand 9, single buffered']
    #allocation12 [shape = 's32[1]{0}', space=sflag, size = 0x4, scoped, tag = 'scoped memory for tpu_custom_call.1']
    #allocation13 [shape = 'u8[8192]{0}', space=vmem, size = 0x2000, scoped, tag = 'output window, operand 0, single buffered']
    %16 = vsyncpa [#allocation3], 0
    %17 = vsyncpa [#allocation6], 0
    %18 = vsyncpa [#allocation9], 0
    %19 = vsyncpa [#allocation12], 0
    %20 = vsyncpa [#allocation4], 0
    // Predicated region
    $region2: #{tpu_custom_call.1} parent=1 // pred_check
      _
    $region3: #{tpu_custom_call.1} parent=1 // pred_check_branch
      %22 = sbr.rel (0) target = $region5
    $region4: #{tpu_custom_call.1} parent=1 // pred_region
      %24 = vsyncadd [#allocation3], 0
      %s25 = sshll.u32 %s0, 4
      %s26 = int_to_ptr.hbm [resolvable:$true] %s25
      %s27 = sshll.u32 [#allocation2], 4
      %s28 = int_to_ptr.vmem [resolvable:$true] %s27
      %33 = dma.hbm_to_vmem [thread:$0]  %s26, 256, %s28, [#allocation3], 128, 128, 8
    $region5: #{tpu_custom_call.1} parent=1 // pred_fallthru
      _
    // Predicated region
    $region6: #{tpu_custom_call.1} parent=1 // pred_check
      _
    $region7: #{tpu_custom_call.1} parent=1 // pred_check_branch
      %35 = sbr.rel (0) target = $region9
    $region8: #{tpu_custom_call.1} parent=1 // pred_region
      %37 = vsyncadd [#allocation6], 0
      %s38 = sshll.u32 %s1, 4
      %s39 = int_to_ptr.hbm [resolvable:$true] %s38
      %s40 = sshll.u32 [#allocation5], 4
      %s41 = int_to_ptr.vmem [resolvable:$true] %s40
      %46 = dma.hbm_to_vmem [thread:$0]  %s39, 2048, %s41, [#allocation6], 128, 128, 8
    $region9: #{tpu_custom_call.1} parent=1 // pred_fallthru
      _
    // Predicated region
    $region10: #{tpu_custom_call.1} parent=1 // pred_check
      _
    $region11: #{tpu_custom_call.1} parent=1 // pred_check_branch
      %48 = sbr.rel (0) target = $region13
    $region12: #{tpu_custom_call.1} parent=1 // pred_region
      _
    $region13: #{tpu_custom_call.1} parent=1 // pred_fallthru
      _
    // Predicated region
    $region14: #{tpu_custom_call.1} parent=1 // pred_check
      _
    $region15: #{tpu_custom_call.1} parent=1 // pred_check_branch
      %50 = sbr.rel (0) target = $region17
    $region16: #{tpu_custom_call.1} parent=1 // pred_region
      %52 = vsyncadd [#allocation6], 0
      %s53 = sshll.u32 %s3, 4
      %s54 = int_to_ptr.hbm [resolvable:$true] %s53
      %s55 = sshll.u32 [#allocation7], 4
      %s56 = int_to_ptr.vmem [resolvable:$true] %s55
      %61 = dma.hbm_to_vmem [thread:$0]  %s54, 2048, %s56, [#allocation6], 128, 128, 8
    $region17: #{tpu_custom_call.1} parent=1 // pred_fallthru
      _
    // Predicated region
    $region18: #{tpu_custom_call.1} parent=1 // pred_check
      _
    $region19: #{tpu_custom_call.1} parent=1 // pred_check_branch
      %63 = sbr.rel (0) target = $region21
    $region20: #{tpu_custom_call.1} parent=1 // pred_region
      _
    $region21: #{tpu_custom_call.1} parent=1 // pred_fallthru
      _
    // Predicated region
    $region22: #{tpu_custom_call.1} parent=1 // pred_check
      _
    $region23: #{tpu_custom_call.1} parent=1 // pred_check_branch
      %65 = sbr.rel (0) target = $region25
    $region24: #{tpu_custom_call.1} parent=1 // pred_region
      %67 = vsyncadd [#allocation9], 0
      %s68 = sshll.u32 %s5, 4
      %s69 = int_to_ptr.hbm [resolvable:$true] %s68
      %s70 = sshll.u32 [#allocation8], 4
      %s71 = int_to_ptr.vmem [resolvable:$true] %s70
      %76 = dma.hbm_to_vmem [thread:$0]  %s69, 2048, %s71, [#allocation9], 128, 128, 8
    $region25: #{tpu_custom_call.1} parent=1 // pred_fallthru
      _
    // Predicated region
    $region26: #{tpu_custom_call.1} parent=1 // pred_check
      _
    $region27: #{tpu_custom_call.1} parent=1 // pred_check_branch
      %78 = sbr.rel (0) target = $region29
    $region28: #{tpu_custom_call.1} parent=1 // pred_region
      _
    $region29: #{tpu_custom_call.1} parent=1 // pred_fallthru
      _
    // Predicated region
    $region30: #{tpu_custom_call.1} parent=1 // pred_check
      _
    $region31: #{tpu_custom_call.1} parent=1 // pred_check_branch
      %80 = sbr.rel (0) target = $region33
    $region32: #{tpu_custom_call.1} parent=1 // pred_region
      %82 = vsyncadd [#allocation9], 0
      %s83 = sshll.u32 %s7, 4
      %s84 = int_to_ptr.hbm [resolvable:$true] %s83
      %s85 = sshll.u32 [#allocation10], 4
      %s86 = int_to_ptr.vmem [resolvable:$true] %s85
      %91 = dma.hbm_to_vmem [thread:$0]  %s84, 2048, %s86, [#allocation9], 128, 128, 8
    $region33: #{tpu_custom_call.1} parent=1 // pred_fallthru
      _
    // Predicated region
    $region34: #{tpu_custom_call.1} parent=1 // pred_check
      _
    $region35: #{tpu_custom_call.1} parent=1 // pred_check_branch
      %93 = sbr.rel (0) target = $region37
    $region36: #{tpu_custom_call.1} parent=1 // pred_region
      _
    $region37: #{tpu_custom_call.1} parent=1 // pred_fallthru
      _
    // Predicated region
    $region38: #{tpu_custom_call.1} parent=1 // pred_check
      _
    $region39: #{tpu_custom_call.1} parent=1 // pred_check_branch
      %95 = sbr.rel (0) target = $region41
    $region40: #{tpu_custom_call.1} parent=1 // pred_region
      %97 = vsyncadd [#allocation12], 0
      %s98 = sshll.u32 %s9, 4
      %s99 = int_to_ptr.hbm [resolvable:$true] %s98
      %s100 = sshll.u32 [#allocation11], 4
      %s101 = int_to_ptr.vmem [resolvable:$true] %s100
      %106 = dma.hbm_to_vmem [thread:$0]  %s99, 2048, %s101, [#allocation12], 128, 128, 8
    $region41: #{tpu_custom_call.1} parent=1 // pred_fallthru
      _
    // Predicated region
    $region42: #{tpu_custom_call.1} parent=1 // pred_check
      _
    $region43: #{tpu_custom_call.1} parent=1 // pred_check_branch
      %108 = sbr.rel (0) target = $region45
    $region44: #{tpu_custom_call.1} parent=1 // pred_region
      _
    $region45: #{tpu_custom_call.1} parent=1 // pred_fallthru
      _
    // Predicated region
    $region46: #{tpu_custom_call.1} parent=1 // pred_check
      _
    $region47: #{tpu_custom_call.1} parent=1 // pred_check_branch
      %110 = sbr.rel (0) target = $region49
    $region48: #{tpu_custom_call.1} parent=1 // pred_region
      %112 = dma.done [#allocation3], 256
    $region49: #{tpu_custom_call.1} parent=1 // pred_fallthru
      _
    // Predicated region
    $region50: #{tpu_custom_call.1} parent=1 // pred_check
      _
    $region51: #{tpu_custom_call.1} parent=1 // pred_check_branch
      %114 = sbr.rel (0) target = $region53
    $region52: #{tpu_custom_call.1} parent=1 // pred_region
      %116 = dma.done [#allocation6], 2048
    $region53: #{tpu_custom_call.1} parent=1 // pred_fallthru
      _
    // Predicated region
    $region54: #{tpu_custom_call.1} parent=1 // pred_check
      _
    $region55: #{tpu_custom_call.1} parent=1 // pred_check_branch
      %118 = sbr.rel (0) target = $region57
    $region56: #{tpu_custom_call.1} parent=1 // pred_region
      %120 = dma.done [#allocation6], 2048
    $region57: #{tpu_custom_call.1} parent=1 // pred_fallthru
      _
    // Predicated region
    $region58: #{tpu_custom_call.1} parent=1 // pred_check
      _
    $region59: #{tpu_custom_call.1} parent=1 // pred_check_branch
      %122 = sbr.rel (0) target = $region61
    $region60: #{tpu_custom_call.1} parent=1 // pred_region
      %124 = dma.done [#allocation9], 2048
    $region61: #{tpu_custom_call.1} parent=1 // pred_fallthru
      _
    // Predicated region
    $region62: #{tpu_custom_call.1} parent=1 // pred_check
      _
    $region63: #{tpu_custom_call.1} parent=1 // pred_check_branch
      %126 = sbr.rel (0) target = $region65
    $region64: #{tpu_custom_call.1} parent=1 // pred_region
      %128 = dma.done [#allocation9], 2048
    $region65: #{tpu_custom_call.1} parent=1 // pred_fallthru
      _
    // Predicated region
    $region66: #{tpu_custom_call.1} parent=1 // pred_check
      _
    $region67: #{tpu_custom_call.1} parent=1 // pred_check_branch
      %130 = sbr.rel (0) target = $region69
    $region68: #{tpu_custom_call.1} parent=1 // pred_region
      %132 = dma.done [#allocation12], 2048
    $region69: #{tpu_custom_call.1} parent=1 // pred_fallthru
      _
    %v133 = vld [vmem:[#allocation2] sm:$0xff]
    %v134 = vld [vmem:[#allocation2 + $0x8] sm:$0xff]
    %v135 = vld [vmem:[#allocation5] sm:$0xff]
    %v136 = vld [vmem:[#allocation5 + $0x8] sm:$0xff]
    %v137 = vld [vmem:[#allocation5 + $0x10] sm:$0xff]
    %v138 = vld [vmem:[#allocation5 + $0x18] sm:$0xff]
    %v139 = vld [vmem:[#allocation5 + $0x20] sm:$0xff]
    %v140 = vld [vmem:[#allocation5 + $0x28] sm:$0xff]
    %v141 = vld [vmem:[#allocation5 + $0x30] sm:$0xff]
    %v142 = vld [vmem:[#allocation5 + $0x38] sm:$0xff]
    %v143 = vld [vmem:[#allocation5 + $0x40] sm:$0xff]
    %v144 = vld [vmem:[#allocation5 + $0x48] sm:$0xff]
    %v145 = vld [vmem:[#allocation5 + $0x50] sm:$0xff]
    %v146 = vld [vmem:[#allocation5 + $0x58] sm:$0xff]
    %v147 = vld [vmem:[#allocation5 + $0x60] sm:$0xff]
    %v148 = vld [vmem:[#allocation5 + $0x68] sm:$0xff]
    %v149 = vld [vmem:[#allocation5 + $0x70] sm:$0xff]
    %v150 = vld [vmem:[#allocation5 + $0x78] sm:$0xff]
    %v151 = vld [vmem:[%s2] sm:$0x1]
    %v153 = vperm.slane %v151, 0
    %155 = vmatpush.msra.mxu0 %v150
    %156 = vmatpush.msra.mxu0 %v149
    %157 = vmatpush.msra.mxu0 %v148
    %158 = vmatpush.msra.mxu0 %v147
    %159 = vmatpush.msra.mxu0 %v146
    %160 = vmatpush.msra.mxu0 %v145
    %161 = vmatpush.msra.mxu0 %v144
    %162 = vmatpush.msra.mxu0 %v143
    %163 = vmatpush.msra.mxu0 %v142
    %164 = vmatpush.msra.mxu0 %v141
    %165 = vmatpush.msra.mxu0 %v140
    %166 = vmatpush.msra.mxu0 %v139
    %167 = vmatpush.msra.mxu0 %v138
    %168 = vmatpush.msra.mxu0 %v137
    %169 = vmatpush.msra.mxu0 %v136
    %170 = vmatpush.msra.mxu0 %v135
    %171 = vmatmul.f32.gmra.mxu0 %v133
    %v172 = vpop.f32.mrf.mxu0
    %v173 = vadd.f32 %v153, %v172
    %174 = vmatmul.f32.gmra.mxu0 %v134
    %v175 = vpop.f32.mrf.mxu0
    %v176 = vadd.f32 %v153, %v175
    %177 = vdwg.mxu0
    %v178 = vmax.f32 %v173, 0.0
    %v179 = vmax.f32 %v176, 0.0
    %v180 = vld [vmem:[#allocation7] sm:$0xff]
    %v181 = vld [vmem:[#allocation7 + $0x8] sm:$0xff]
    %v182 = vld [vmem:[#allocation7 + $0x10] sm:$0xff]
    %v183 = vld [vmem:[#allocation7 + $0x18] sm:$0xff]
    %v184 = vld [vmem:[#allocation7 + $0x20] sm:$0xff]
    %v185 = vld [vmem:[#allocation7 + $0x28] sm:$0xff]
    %v186 = vld [vmem:[#allocation7 + $0x30] sm:$0xff]
    %v187 = vld [vmem:[#allocation7 + $0x38] sm:$0xff]
    %v188 = vld [vmem:[#allocation7 + $0x40] sm:$0xff]
    %v189 = vld [vmem:[#allocation7 + $0x48] sm:$0xff]
    %v190 = vld [vmem:[#allocation7 + $0x50] sm:$0xff]
    %v191 = vld [vmem:[#allocation7 + $0x58] sm:$0xff]
    %v192 = vld [vmem:[#allocation7 + $0x60] sm:$0xff]
    %v193 = vld [vmem:[#allocation7 + $0x68] sm:$0xff]
    %v194 = vld [vmem:[#allocation7 + $0x70] sm:$0xff]
    %v195 = vld [vmem:[#allocation7 + $0x78] sm:$0xff]
    %v196 = vld [vmem:[%s4] sm:$0x1]
    %v198 = vperm.slane %v196, 0
    %200 = vmatpush.msra.mxu0 %v195
    %201 = vmatpush.msra.mxu0 %v194
    %202 = vmatpush.msra.mxu0 %v193
    %203 = vmatpush.msra.mxu0 %v192
    %204 = vmatpush.msra.mxu0 %v191
    %205 = vmatpush.msra.mxu0 %v190
    %206 = vmatpush.msra.mxu0 %v189
    %207 = vmatpush.msra.mxu0 %v188
    %208 = vmatpush.msra.mxu0 %v187
    %209 = vmatpush.msra.mxu0 %v186
    %210 = vmatpush.msra.mxu0 %v185
    %211 = vmatpush.msra.mxu0 %v184
    %212 = vmatpush.msra.mxu0 %v183
    %213 = vmatpush.msra.mxu0 %v182
    %214 = vmatpush.msra.mxu0 %v181
    %215 = vmatpush.msra.mxu0 %v180
    %216 = vmatmul.f32.gmra.mxu0 %v178
    %v217 = vpop.f32.mrf.mxu0
    %v218 = vadd.f32 %v198, %v217
    %219 = vmatmul.f32.gmra.mxu0 %v179
    %v220 = vpop.f32.mrf.mxu0
    %v221 = vadd.f32 %v198, %v220
    %222 = vdwg.mxu0
    %v223 = vmax.f32 %v218, 0.0
    %v224 = vmax.f32 %v221, 0.0
    %v225 = vld [vmem:[#allocation8] sm:$0xff]
    %v226 = vld [vmem:[#allocation8 + $0x8] sm:$0xff]
    %v227 = vld [vmem:[#allocation8 + $0x10] sm:$0xff]
    %v228 = vld [vmem:[#allocation8 + $0x18] sm:$0xff]
    %v229 = vld [vmem:[#allocation8 + $0x20] sm:$0xff]
    %v230 = vld [vmem:[#allocation8 + $0x28] sm:$0xff]
    %v231 = vld [vmem:[#allocation8 + $0x30] sm:$0xff]
    %v232 = vld [vmem:[#allocation8 + $0x38] sm:$0xff]
    %v233 = vld [vmem:[#allocation8 + $0x40] sm:$0xff]
    %v234 = vld [vmem:[#allocation8 + $0x48] sm:$0xff]
    %v235 = vld [vmem:[#allocation8 + $0x50] sm:$0xff]
    %v236 = vld [vmem:[#allocation8 + $0x58] sm:$0xff]
    %v237 = vld [vmem:[#allocation8 + $0x60] sm:$0xff]
    %v238 = vld [vmem:[#allocation8 + $0x68] sm:$0xff]
    %v239 = vld [vmem:[#allocation8 + $0x70] sm:$0xff]
    %v240 = vld [vmem:[#allocation8 + $0x78] sm:$0xff]
    %v241 = vld [vmem:[%s6] sm:$0x1]
    %v243 = vperm.slane %v241, 0
    %245 = vmatpush.msra.mxu0 %v240
    %246 = vmatpush.msra.mxu0 %v239
    %247 = vmatpush.msra.mxu0 %v238
    %248 = vmatpush.msra.mxu0 %v237
    %249 = vmatpush.msra.mxu0 %v236
    %250 = vmatpush.msra.mxu0 %v235
    %251 = vmatpush.msra.mxu0 %v234
    %252 = vmatpush.msra.mxu0 %v233
    %253 = vmatpush.msra.mxu0 %v232
    %254 = vmatpush.msra.mxu0 %v231
    %255 = vmatpush.msra.mxu0 %v230
    %256 = vmatpush.msra.mxu0 %v229
    %257 = vmatpush.msra.mxu0 %v228
    %258 = vmatpush.msra.mxu0 %v227
    %259 = vmatpush.msra.mxu0 %v226
    %260 = vmatpush.msra.mxu0 %v225
    %261 = vmatmul.f32.gmra.mxu0 %v223
    %v262 = vpop.f32.mrf.mxu0
    %v263 = vadd.f32 %v243, %v262
    %264 = vmatmul.f32.gmra.mxu0 %v224
    %v265 = vpop.f32.mrf.mxu0
    %v266 = vadd.f32 %v243, %v265
    %267 = vdwg.mxu0
    %v268 = vmax.f32 %v263, 0.0
    %v269 = vmax.f32 %v266, 0.0
    %v270 = vld [vmem:[#allocation10] sm:$0xff]
    %v271 = vld [vmem:[#allocation10 + $0x8] sm:$0xff]
    %v272 = vld [vmem:[#allocation10 + $0x10] sm:$0xff]
    %v273 = vld [vmem:[#allocation10 + $0x18] sm:$0xff]
    %v274 = vld [vmem:[#allocation10 + $0x20] sm:$0xff]
    %v275 = vld [vmem:[#allocation10 + $0x28] sm:$0xff]
    %v276 = vld [vmem:[#allocation10 + $0x30] sm:$0xff]
    %v277 = vld [vmem:[#allocation10 + $0x38] sm:$0xff]
    %v278 = vld [vmem:[#allocation10 + $0x40] sm:$0xff]
    %v279 = vld [vmem:[#allocation10 + $0x48] sm:$0xff]
    %v280 = vld [vmem:[#allocation10 + $0x50] sm:$0xff]
    %v281 = vld [vmem:[#allocation10 + $0x58] sm:$0xff]
    %v282 = vld [vmem:[#allocation10 + $0x60] sm:$0xff]
    %v283 = vld [vmem:[#allocation10 + $0x68] sm:$0xff]
    %v284 = vld [vmem:[#allocation10 + $0x70] sm:$0xff]
    %v285 = vld [vmem:[#allocation10 + $0x78] sm:$0xff]
    %v286 = vld [vmem:[%s8] sm:$0x1]
    %v288 = vperm.slane %v286, 0
    %290 = vmatpush.msra.mxu0 %v285
    %291 = vmatpush.msra.mxu0 %v284
    %292 = vmatpush.msra.mxu0 %v283
    %293 = vmatpush.msra.mxu0 %v282
    %294 = vmatpush.msra.mxu0 %v281
    %295 = vmatpush.msra.mxu0 %v280
    %296 = vmatpush.msra.mxu0 %v279
    %297 = vmatpush.msra.mxu0 %v278
    %298 = vmatpush.msra.mxu0 %v277
    %299 = vmatpush.msra.mxu0 %v276
    %300 = vmatpush.msra.mxu0 %v275
    %301 = vmatpush.msra.mxu0 %v274
    %302 = vmatpush.msra.mxu0 %v273
    %303 = vmatpush.msra.mxu0 %v272
    %304 = vmatpush.msra.mxu0 %v271
    %305 = vmatpush.msra.mxu0 %v270
    %306 = vmatmul.f32.gmra.mxu0 %v268
    %v307 = vpop.f32.mrf.mxu0
    %v308 = vadd.f32 %v288, %v307
    %309 = vmatmul.f32.gmra.mxu0 %v269
    %v310 = vpop.f32.mrf.mxu0
    %v311 = vadd.f32 %v288, %v310
    %312 = vdwg.mxu0
    %v313 = vmax.f32 %v308, 0.0
    %v314 = vmax.f32 %v311, 0.0
    %v315 = vld [vmem:[#allocation11] sm:$0xff]
    %v316 = vld [vmem:[#allocation11 + $0x8] sm:$0xff]
    %v317 = vld [vmem:[#allocation11 + $0x10] sm:$0xff]
    %v318 = vld [vmem:[#allocation11 + $0x18] sm:$0xff]
    %v319 = vld [vmem:[#allocation11 + $0x20] sm:$0xff]
    %v320 = vld [vmem:[#allocation11 + $0x28] sm:$0xff]
    %v321 = vld [vmem:[#allocation11 + $0x30] sm:$0xff]
    %v322 = vld [vmem:[#allocation11 + $0x38] sm:$0xff]
    %v323 = vld [vmem:[#allocation11 + $0x40] sm:$0xff]
    %v324 = vld [vmem:[#allocation11 + $0x48] sm:$0xff]
    %v325 = vld [vmem:[#allocation11 + $0x50] sm:$0xff]
    %v326 = vld [vmem:[#allocation11 + $0x58] sm:$0xff]
    %v327 = vld [vmem:[#allocation11 + $0x60] sm:$0xff]
    %v328 = vld [vmem:[#allocation11 + $0x68] sm:$0xff]
    %v329 = vld [vmem:[#allocation11 + $0x70] sm:$0xff]
    %v330 = vld [vmem:[#allocation11 + $0x78] sm:$0xff]
    %v331 = vld [vmem:[%s10] sm:$0x1]
    %v333 = vperm.slane %v331, 0
    %335 = vmatpush.msra.mxu0 %v330
    %336 = vmatpush.msra.mxu0 %v329
    %337 = vmatpush.msra.mxu0 %v328
    %338 = vmatpush.msra.mxu0 %v327
    %339 = vmatpush.msra.mxu0 %v326
    %340 = vmatpush.msra.mxu0 %v325
    %341 = vmatpush.msra.mxu0 %v324
    %342 = vmatpush.msra.mxu0 %v323
    %343 = vmatpush.msra.mxu0 %v322
    %344 = vmatpush.msra.mxu0 %v321
    %345 = vmatpush.msra.mxu0 %v320
    %346 = vmatpush.msra.mxu0 %v319
    %347 = vmatpush.msra.mxu0 %v318
    %348 = vmatpush.msra.mxu0 %v317
    %349 = vmatpush.msra.mxu0 %v316
    %350 = vmatpush.msra.mxu0 %v315
    %351 = vmatmul.f32.gmra.mxu0 %v313
    %v352 = vpop.f32.mrf.mxu0
    %v353 = vadd.f32 %v333, %v352
    %354 = vmatmul.f32.gmra.mxu0 %v314
    %v355 = vpop.f32.mrf.mxu0
    %v356 = vadd.f32 %v333, %v355
    %357 = vdwg.mxu0
    %v358 = vxor.u32 %v353, 2147483648
    %v359 = vxor.u32 %v356, 2147483648
    %v360 = vmul.f32 %v358, 1.442695
    %v361 = vpow.pop %v360
    %v362 = vmul.f32 %v359, 1.442695
    %v363 = vpow.pop %v362
    %v364 = vadd.f32 %v361, 1.0
    %v365 = vadd.f32 %v363, 1.0
    %v366 = vrcp.pop %v364
    %v367 = vmul.f32 %v364, %v366
    %v368 = vsub.f32 1.0, %v367
    %v369 = vmul.f32 %v366, %v368
    %v370 = vadd.f32 %v366, %v369
    %vm371 = vweird.f32 %v364
    %vm372 = vweird.f32 %v366
    %vm373 = vmor %vm371, %vm372
    %v374 = vsel %vm373, %v366, %v370
    %v375 = vand.u32 2147483647, %v364
    %vm376 = vcmp.eq.f32.partialorder %v375, 8.507059e+37
    %v377 = vand.u32 %v364, 2147483648
    %v378 = vor.u32 1.1754944e-38, %v377
    %v379 = vsel %vm376, %v378, %v374
    %v380 = vmul.f32 1.0, %v379
    %v381 = vrcp.pop %v365
    %v382 = vmul.f32 %v365, %v381
    %v383 = vsub.f32 1.0, %v382
    %v384 = vmul.f32 %v381, %v383
    %v385 = vadd.f32 %v381, %v384
    %vm386 = vweird.f32 %v365
    %vm387 = vweird.f32 %v381
    %vm388 = vmor %vm386, %vm387
    %v389 = vsel %vm388, %v381, %v385
    %v390 = vand.u32 2147483647, %v365
    %vm391 = vcmp.eq.f32.partialorder %v390, 8.507059e+37
    %v392 = vand.u32 %v365, 2147483648
    %v393 = vor.u32 1.1754944e-38, %v392
    %v394 = vsel %vm391, %v393, %v389
    %v395 = vmul.f32 1.0, %v394
    %396 = vst [vmem:[#allocation13] sm:$0xff] %v380
    %397 = vst [vmem:[#allocation13 + $0x8] sm:$0xff] %v395
    // Predicated region
    $region70: #{tpu_custom_call.1} parent=1 // pred_check
      _
    $region71: #{tpu_custom_call.1} parent=1 // pred_check_branch
      %399 = sbr.rel (0) target = $region73
    $region72: #{tpu_custom_call.1} parent=1 // pred_region
      %401 = vsyncadd [#allocation4], 0
      %s402 = sshll.u32 [#allocation13], 4
      %s403 = int_to_ptr.vmem [resolvable:$true] %s402
      %s404 = sshll.u32 %s11, 4
      %s405 = int_to_ptr.hbm [resolvable:$true] %s404
      %410 = dma.vmem_to_hbm [thread:$0]  %s403, 256, %s405, [#allocation4], 128, 128, 8
    $region73: #{tpu_custom_call.1} parent=1 // pred_fallthru
      _
    // Predicated region
    $region74: #{tpu_custom_call.1} parent=1 // pred_check
      _
    $region75: #{tpu_custom_call.1} parent=1 // pred_check_branch
      %412 = sbr.rel (0) target = $region77
    $region76: #{tpu_custom_call.1} parent=1 // pred_region
      %414 = dma.done [#allocation4], 256
    $region77: #{tpu_custom_call.1} parent=1 // pred_fallthru
      _
    %415 = vsyncpa [#allocation3], 1
    %416 = vsyncpa [#allocation6], 1
    %417 = vsyncpa [#allocation9], 1
    %418 = vsyncpa [#allocation12], 1
    %419 = vsyncpa [#allocation4], 1

// kernel: tpu_custom_call.1
$region0: #{tpu_custom_call.1}
  #allocation0 [shape = 'u32[]', space=smem, size = 0x4, offset = 0x4, fixed_abs, tag = 'smem constant byte address 0x4 - core index']
  #allocation1 [shape = 'u32[72,128]{1,0:T(1,128)}', space=vmem, size = 0x9000, scoped, tag = 'internal scratch']
  %s0 = inlined_call_operand.hbm [shape: f32[16,128], index: 0, kind: input, shape index: {}]
  %s1 = inlined_call_operand.hbm [shape: f32[128,128], index: 1, kind: input, shape index: {}]
  %s2 = inlined_call_operand.vmem [shape: f32[1,128], index: 2, kind: input, shape index: {}]
  %s3 = inlined_call_operand.hbm [shape: f32[128,128], index: 3, kind: input, shape index: {}]
  %s4 = inlined_call_operand.vmem [shape: f32[1,128], index: 4, kind: input, shape index: {}]
  %s5 = inlined_call_operand.hbm [shape: f32[128,128], index: 5, kind: input, shape index: {}]
  %s6 = inlined_call_operand.vmem [shape: f32[1,128], index: 6, kind: input, shape index: {}]
  %s7 = inlined_call_operand.hbm [shape: f32[128,128], index: 7, kind: input, shape index: {}]
  %s8 = inlined_call_operand.vmem [shape: f32[1,128], index: 8, kind: input, shape index: {}]
  %s9 = inlined_call_operand.hbm [shape: f32[128,128], index: 9, kind: input, shape index: {}]
  %s10 = inlined_call_operand.vmem [shape: f32[1,128], index: 10, kind: input, shape index: {}]
  %s11 = inlined_call_operand.hbm [shape: f32[16,128], index: 11, kind: output, shape index: {}]
  %s12 = sld [smem:[#allocation0]]
  $region78: #{tpu_custom_call.1} parent=0
    _
  %s14 = ssub.s32 1, %s12
  %s15 = scalar_select 0, %s14, %s12
  $region1: #{tpu_custom_call.1} parent=0
    #allocation2 [shape = 'u8[8192]{0}', space=vmem, size = 0x2000, scoped, tag = 'input window, operand 0, single buffered']
    #allocation3 [shape = 's32[1]{0}', space=sflag, size = 0x4, scoped, tag = 'scoped memory for tpu_custom_call.1']
    #allocation4 [shape = 's32[1]{0}', space=sflag, size = 0x4, scoped, tag = 'scoped memory for tpu_custom_call.1']
    #allocation5 [shape = 'u8[65536]{0}', space=vmem, size = 0x10000, scoped, tag = 'input window, operand 1, single buffered']
    #allocation6 [shape = 's32[1]{0}', space=sflag, size = 0x4, scoped, tag = 'scoped memory for tpu_custom_call.1']
    #allocation7 [shape = 'u8[65536]{0}', space=vmem, size = 0x10000, scoped, tag = 'input window, operand 3, single buffered']
    #allocation8 [shape = 'u8[65536]{0}', space=vmem, size = 0x10000, scoped, tag = 'input window, operand 5, single buffered']
    #allocation9 [shape = 's32[1]{0}', space=sflag, size = 0x4, scoped, tag = 'scoped memory for tpu_custom_call.1']
    #allocation10 [shape = 'u8[65536]{0}', space=vmem, size = 0x10000, scoped, tag = 'input window, operand 7, single buffered']
    #allocation11 [shape = 'u8[65536]{0}', space=vmem, size = 0x10000, scoped, tag = 'input window, operand 9, single buffered']
    #allocation12 [shape = 's32[1]{0}', space=sflag, size = 0x4, scoped, tag = 'scoped memory for tpu_custom_call.1']
    #allocation13 [shape = 'u8[8192]{0}', space=vmem, size = 0x2000, scoped, tag = 'output window, operand 0, single buffered']
    %16 = vsyncpa [#allocation3], 0
    %17 = vsyncpa [#allocation6], 0
    %18 = vsyncpa [#allocation9], 0
    %19 = vsyncpa [#allocation12], 0
    %20 = vsyncpa [#allocation4], 0
    // Predicated region
    $region2: #{tpu_custom_call.1} parent=1 // pred_check
      _
    $region3: #{tpu_custom_call.1} parent=1 // pred_check_branch
      %22 = sbr.rel (0) target = $region5
    $region4: #{tpu_custom_call.1} parent=1 // pred_region
      %24 = vsyncadd [#allocation3], 0
      %s25 = sshll.u32 %s0, 4
      %s26 = int_to_ptr.hbm [resolvable:$true] %s25
      %s27 = sshll.u32 [#allocation2], 4
      %s28 = int_to_ptr.vmem [resolvable:$true] %s27
      %33 = dma.hbm_to_vmem [thread:$0]  %s26, 256, %s28, [#allocation3], 128, 128, 8
    $region5: #{tpu_custom_call.1} parent=1 // pred_fallthru
      _
    // Predicated region
    $region6: #{tpu_custom_call.1} parent=1 // pred_check
      _
    $region7: #{tpu_custom_call.1} parent=1 // pred_check_branch
      %35 = sbr.rel (0) target = $region9
    $region8: #{tpu_custom_call.1} parent=1 // pred_region
      %37 = vsyncadd [#allocation6], 0
      %s38 = sshll.u32 %s1, 4
      %s39 = int_to_ptr.hbm [resolvable:$true] %s38
      %s40 = sshll.u32 [#allocation5], 4
      %s41 = int_to_ptr.vmem [resolvable:$true] %s40
      %46 = dma.hbm_to_vmem [thread:$0]  %s39, 2048, %s41, [#allocation6], 128, 128, 8
    $region9: #{tpu_custom_call.1} parent=1 // pred_fallthru
      _
    // Predicated region
    $region10: #{tpu_custom_call.1} parent=1 // pred_check
      _
    $region11: #{tpu_custom_call.1} parent=1 // pred_check_branch
      %48 = sbr.rel (0) target = $region13
    $region12: #{tpu_custom_call.1} parent=1 // pred_region
      _
    $region13: #{tpu_custom_call.1} parent=1 // pred_fallthru
      _
    // Predicated region
    $region14: #{tpu_custom_call.1} parent=1 // pred_check
      _
    $region15: #{tpu_custom_call.1} parent=1 // pred_check_branch
      %50 = sbr.rel (0) target = $region17
    $region16: #{tpu_custom_call.1} parent=1 // pred_region
      %52 = vsyncadd [#allocation6], 0
      %s53 = sshll.u32 %s3, 4
      %s54 = int_to_ptr.hbm [resolvable:$true] %s53
      %s55 = sshll.u32 [#allocation7], 4
      %s56 = int_to_ptr.vmem [resolvable:$true] %s55
      %61 = dma.hbm_to_vmem [thread:$0]  %s54, 2048, %s56, [#allocation6], 128, 128, 8
    $region17: #{tpu_custom_call.1} parent=1 // pred_fallthru
      _
    // Predicated region
    $region18: #{tpu_custom_call.1} parent=1 // pred_check
      _
    $region19: #{tpu_custom_call.1} parent=1 // pred_check_branch
      %63 = sbr.rel (0) target = $region21
    $region20: #{tpu_custom_call.1} parent=1 // pred_region
      _
    $region21: #{tpu_custom_call.1} parent=1 // pred_fallthru
      _
    // Predicated region
    $region22: #{tpu_custom_call.1} parent=1 // pred_check
      _
    $region23: #{tpu_custom_call.1} parent=1 // pred_check_branch
      %65 = sbr.rel (0) target = $region25
    $region24: #{tpu_custom_call.1} parent=1 // pred_region
      %67 = vsyncadd [#allocation9], 0
      %s68 = sshll.u32 %s5, 4
      %s69 = int_to_ptr.hbm [resolvable:$true] %s68
      %s70 = sshll.u32 [#allocation8], 4
      %s71 = int_to_ptr.vmem [resolvable:$true] %s70
      %76 = dma.hbm_to_vmem [thread:$0]  %s69, 2048, %s71, [#allocation9], 128, 128, 8
    $region25: #{tpu_custom_call.1} parent=1 // pred_fallthru
      _
    // Predicated region
    $region26: #{tpu_custom_call.1} parent=1 // pred_check
      _
    $region27: #{tpu_custom_call.1} parent=1 // pred_check_branch
      %78 = sbr.rel (0) target = $region29
    $region28: #{tpu_custom_call.1} parent=1 // pred_region
      _
    $region29: #{tpu_custom_call.1} parent=1 // pred_fallthru
      _
    // Predicated region
    $region30: #{tpu_custom_call.1} parent=1 // pred_check
      _
    $region31: #{tpu_custom_call.1} parent=1 // pred_check_branch
      %80 = sbr.rel (0) target = $region33
    $region32: #{tpu_custom_call.1} parent=1 // pred_region
      %82 = vsyncadd [#allocation9], 0
      %s83 = sshll.u32 %s7, 4
      %s84 = int_to_ptr.hbm [resolvable:$true] %s83
      %s85 = sshll.u32 [#allocation10], 4
      %s86 = int_to_ptr.vmem [resolvable:$true] %s85
      %91 = dma.hbm_to_vmem [thread:$0]  %s84, 2048, %s86, [#allocation9], 128, 128, 8
    $region33: #{tpu_custom_call.1} parent=1 // pred_fallthru
      _
    // Predicated region
    $region34: #{tpu_custom_call.1} parent=1 // pred_check
      _
    $region35: #{tpu_custom_call.1} parent=1 // pred_check_branch
      %93 = sbr.rel (0) target = $region37
    $region36: #{tpu_custom_call.1} parent=1 // pred_region
      _
    $region37: #{tpu_custom_call.1} parent=1 // pred_fallthru
      _
    // Predicated region
    $region38: #{tpu_custom_call.1} parent=1 // pred_check
      _
    $region39: #{tpu_custom_call.1} parent=1 // pred_check_branch
      %95 = sbr.rel (0) target = $region41
    $region40: #{tpu_custom_call.1} parent=1 // pred_region
      %97 = vsyncadd [#allocation12], 0
      %s98 = sshll.u32 %s9, 4
      %s99 = int_to_ptr.hbm [resolvable:$true] %s98
      %s100 = sshll.u32 [#allocation11], 4
      %s101 = int_to_ptr.vmem [resolvable:$true] %s100
      %106 = dma.hbm_to_vmem [thread:$0]  %s99, 2048, %s101, [#allocation12], 128, 128, 8
    $region41: #{tpu_custom_call.1} parent=1 // pred_fallthru
      _
    // Predicated region
    $region42: #{tpu_custom_call.1} parent=1 // pred_check
      _
    $region43: #{tpu_custom_call.1} parent=1 // pred_check_branch
      %108 = sbr.rel (0) target = $region45
    $region44: #{tpu_custom_call.1} parent=1 // pred_region
      _
    $region45: #{tpu_custom_call.1} parent=1 // pred_fallthru
      _
    // Predicated region
    $region46: #{tpu_custom_call.1} parent=1 // pred_check
      _
    $region47: #{tpu_custom_call.1} parent=1 // pred_check_branch
      %110 = sbr.rel (0) target = $region49
    $region48: #{tpu_custom_call.1} parent=1 // pred_region
      %112 = dma.done [#allocation3], 256
    $region49: #{tpu_custom_call.1} parent=1 // pred_fallthru
      _
    // Predicated region
    $region50: #{tpu_custom_call.1} parent=1 // pred_check
      _
    $region51: #{tpu_custom_call.1} parent=1 // pred_check_branch
      %114 = sbr.rel (0) target = $region53
    $region52: #{tpu_custom_call.1} parent=1 // pred_region
      %116 = dma.done [#allocation6], 2048
    $region53: #{tpu_custom_call.1} parent=1 // pred_fallthru
      _
    // Predicated region
    $region54: #{tpu_custom_call.1} parent=1 // pred_check
      _
    $region55: #{tpu_custom_call.1} parent=1 // pred_check_branch
      %118 = sbr.rel (0) target = $region57
    $region56: #{tpu_custom_call.1} parent=1 // pred_region
      %120 = dma.done [#allocation6], 2048
    $region57: #{tpu_custom_call.1} parent=1 // pred_fallthru
      _
    // Predicated region
    $region58: #{tpu_custom_call.1} parent=1 // pred_check
      _
    $region59: #{tpu_custom_call.1} parent=1 // pred_check_branch
      %122 = sbr.rel (0) target = $region61
    $region60: #{tpu_custom_call.1} parent=1 // pred_region
      %124 = dma.done [#allocation9], 2048
    $region61: #{tpu_custom_call.1} parent=1 // pred_fallthru
      _
    // Predicated region
    $region62: #{tpu_custom_call.1} parent=1 // pred_check
      _
    $region63: #{tpu_custom_call.1} parent=1 // pred_check_branch
      %126 = sbr.rel (0) target = $region65
    $region64: #{tpu_custom_call.1} parent=1 // pred_region
      %128 = dma.done [#allocation9], 2048
    $region65: #{tpu_custom_call.1} parent=1 // pred_fallthru
      _
    // Predicated region
    $region66: #{tpu_custom_call.1} parent=1 // pred_check
      _
    $region67: #{tpu_custom_call.1} parent=1 // pred_check_branch
      %130 = sbr.rel (0) target = $region69
    $region68: #{tpu_custom_call.1} parent=1 // pred_region
      %132 = dma.done [#allocation12], 2048
    $region69: #{tpu_custom_call.1} parent=1 // pred_fallthru
      _
    %v133 = vld [vmem:[#allocation2] sm:$0xff]
    %v134 = vld [vmem:[#allocation2 + $0x8] sm:$0xff]
    %v135 = vld [vmem:[#allocation5] sm:$0xff]
    %v136 = vld [vmem:[#allocation5 + $0x8] sm:$0xff]
    %v137 = vld [vmem:[#allocation5 + $0x10] sm:$0xff]
    %v138 = vld [vmem:[#allocation5 + $0x18] sm:$0xff]
    %v139 = vld [vmem:[#allocation5 + $0x20] sm:$0xff]
    %v140 = vld [vmem:[#allocation5 + $0x28] sm:$0xff]
    %v141 = vld [vmem:[#allocation5 + $0x30] sm:$0xff]
    %v142 = vld [vmem:[#allocation5 + $0x38] sm:$0xff]
    %v143 = vld [vmem:[#allocation5 + $0x40] sm:$0xff]
    %v144 = vld [vmem:[#allocation5 + $0x48] sm:$0xff]
    %v145 = vld [vmem:[#allocation5 + $0x50] sm:$0xff]
    %v146 = vld [vmem:[#allocation5 + $0x58] sm:$0xff]
    %v147 = vld [vmem:[#allocation5 + $0x60] sm:$0xff]
    %v148 = vld [vmem:[#allocation5 + $0x68] sm:$0xff]
    %v149 = vld [vmem:[#allocation5 + $0x70] sm:$0xff]
    %v150 = vld [vmem:[#allocation5 + $0x78] sm:$0xff]
    %v151 = vld [vmem:[%s2] sm:$0x1]
    %v153 = vperm.slane %v151, 0
    %155 = vmatpush.msra.mxu0 %v150
    %156 = vmatpush.msra.mxu0 %v149
    %157 = vmatpush.msra.mxu0 %v148
    %158 = vmatpush.msra.mxu0 %v147
    %159 = vmatpush.msra.mxu0 %v146
    %160 = vmatpush.msra.mxu0 %v145
    %161 = vmatpush.msra.mxu0 %v144
    %162 = vmatpush.msra.mxu0 %v143
    %163 = vmatpush.msra.mxu0 %v142
    %164 = vmatpush.msra.mxu0 %v141
    %165 = vmatpush.msra.mxu0 %v140
    %166 = vmatpush.msra.mxu0 %v139
    %167 = vmatpush.msra.mxu0 %v138
    %168 = vmatpush.msra.mxu0 %v137
    %169 = vmatpush.msra.mxu0 %v136
    %170 = vmatpush.msra.mxu0 %v135
    %171 = vmatmul.f32.gmra.mxu0 %v133
    %v172 = vpop.f32.mrf.mxu0
    %v173 = vadd.f32 %v153, %v172
    %174 = vmatmul.f32.gmra.mxu0 %v134
    %v175 = vpop.f32.mrf.mxu0
    %v176 = vadd.f32 %v153, %v175
    %177 = vdwg.mxu0
    %v178 = vmax.f32 %v173, 0.0
    %v179 = vmax.f32 %v176, 0.0
    %v180 = vld [vmem:[#allocation7] sm:$0xff]
    %v181 = vld [vmem:[#allocation7 + $0x8] sm:$0xff]
    %v182 = vld [vmem:[#allocation7 + $0x10] sm:$0xff]
    %v183 = vld [vmem:[#allocation7 + $0x18] sm:$0xff]
    %v184 = vld [vmem:[#allocation7 + $0x20] sm:$0xff]
    %v185 = vld [vmem:[#allocation7 + $0x28] sm:$0xff]
    %v186 = vld [vmem:[#allocation7 + $0x30] sm:$0xff]
    %v187 = vld [vmem:[#allocation7 + $0x38] sm:$0xff]
    %v188 = vld [vmem:[#allocation7 + $0x40] sm:$0xff]
    %v189 = vld [vmem:[#allocation7 + $0x48] sm:$0xff]
    %v190 = vld [vmem:[#allocation7 + $0x50] sm:$0xff]
    %v191 = vld [vmem:[#allocation7 + $0x58] sm:$0xff]
    %v192 = vld [vmem:[#allocation7 + $0x60] sm:$0xff]
    %v193 = vld [vmem:[#allocation7 + $0x68] sm:$0xff]
    %v194 = vld [vmem:[#allocation7 + $0x70] sm:$0xff]
    %v195 = vld [vmem:[#allocation7 + $0x78] sm:$0xff]
    %v196 = vld [vmem:[%s4] sm:$0x1]
    %v198 = vperm.slane %v196, 0
    %200 = vmatpush.msra.mxu0 %v195
    %201 = vmatpush.msra.mxu0 %v194
    %202 = vmatpush.msra.mxu0 %v193
    %203 = vmatpush.msra.mxu0 %v192
    %204 = vmatpush.msra.mxu0 %v191
    %205 = vmatpush.msra.mxu0 %v190
    %206 = vmatpush.msra.mxu0 %v189
    %207 = vmatpush.msra.mxu0 %v188
    %208 = vmatpush.msra.mxu0 %v187
    %209 = vmatpush.msra.mxu0 %v186
    %210 = vmatpush.msra.mxu0 %v185
    %211 = vmatpush.msra.mxu0 %v184
    %212 = vmatpush.msra.mxu0 %v183
    %213 = vmatpush.msra.mxu0 %v182
    %214 = vmatpush.msra.mxu0 %v181
    %215 = vmatpush.msra.mxu0 %v180
    %216 = vmatmul.f32.gmra.mxu0 %v178
    %v217 = vpop.f32.mrf.mxu0
    %v218 = vadd.f32 %v198, %v217
    %219 = vmatmul.f32.gmra.mxu0 %v179
    %v220 = vpop.f32.mrf.mxu0
    %v221 = vadd.f32 %v198, %v220
    %222 = vdwg.mxu0
    %v223 = vmax.f32 %v218, 0.0
    %v224 = vmax.f32 %v221, 0.0
    %v225 = vld [vmem:[#allocation8] sm:$0xff]
    %v226 = vld [vmem:[#allocation8 + $0x8] sm:$0xff]
    %v227 = vld [vmem:[#allocation8 + $0x10] sm:$0xff]
    %v228 = vld [vmem:[#allocation8 + $0x18] sm:$0xff]
    %v229 = vld [vmem:[#allocation8 + $0x20] sm:$0xff]
    %v230 = vld [vmem:[#allocation8 + $0x28] sm:$0xff]
    %v231 = vld [vmem:[#allocation8 + $0x30] sm:$0xff]
    %v232 = vld [vmem:[#allocation8 + $0x38] sm:$0xff]
    %v233 = vld [vmem:[#allocation8 + $0x40] sm:$0xff]
    %v234 = vld [vmem:[#allocation8 + $0x48] sm:$0xff]
    %v235 = vld [vmem:[#allocation8 + $0x50] sm:$0xff]
    %v236 = vld [vmem:[#allocation8 + $0x58] sm:$0xff]
    %v237 = vld [vmem:[#allocation8 + $0x60] sm:$0xff]
    %v238 = vld [vmem:[#allocation8 + $0x68] sm:$0xff]
    %v239 = vld [vmem:[#allocation8 + $0x70] sm:$0xff]
    %v240 = vld [vmem:[#allocation8 + $0x78] sm:$0xff]
    %v241 = vld [vmem:[%s6] sm:$0x1]
    %v243 = vperm.slane %v241, 0
    %245 = vmatpush.msra.mxu0 %v240
    %246 = vmatpush.msra.mxu0 %v239
    %247 = vmatpush.msra.mxu0 %v238
    %248 = vmatpush.msra.mxu0 %v237
    %249 = vmatpush.msra.mxu0 %v236
    %250 = vmatpush.msra.mxu0 %v235
    %251 = vmatpush.msra.mxu0 %v234
    %252 = vmatpush.msra.mxu0 %v233
    %253 = vmatpush.msra.mxu0 %v232
    %254 = vmatpush.msra.mxu0 %v231
    %255 = vmatpush.msra.mxu0 %v230
    %256 = vmatpush.msra.mxu0 %v229
    %257 = vmatpush.msra.mxu0 %v228
    %258 = vmatpush.msra.mxu0 %v227
    %259 = vmatpush.msra.mxu0 %v226
    %260 = vmatpush.msra.mxu0 %v225
    %261 = vmatmul.f32.gmra.mxu0 %v223
    %v262 = vpop.f32.mrf.mxu0
    %v263 = vadd.f32 %v243, %v262
    %264 = vmatmul.f32.gmra.mxu0 %v224
    %v265 = vpop.f32.mrf.mxu0
    %v266 = vadd.f32 %v243, %v265
    %267 = vdwg.mxu0
    %v268 = vmax.f32 %v263, 0.0
    %v269 = vmax.f32 %v266, 0.0
    %v270 = vld [vmem:[#allocation10] sm:$0xff]
    %v271 = vld [vmem:[#allocation10 + $0x8] sm:$0xff]
    %v272 = vld [vmem:[#allocation10 + $0x10] sm:$0xff]
    %v273 = vld [vmem:[#allocation10 + $0x18] sm:$0xff]
    %v274 = vld [vmem:[#allocation10 + $0x20] sm:$0xff]
    %v275 = vld [vmem:[#allocation10 + $0x28] sm:$0xff]
    %v276 = vld [vmem:[#allocation10 + $0x30] sm:$0xff]
    %v277 = vld [vmem:[#allocation10 + $0x38] sm:$0xff]
    %v278 = vld [vmem:[#allocation10 + $0x40] sm:$0xff]
    %v279 = vld [vmem:[#allocation10 + $0x48] sm:$0xff]
    %v280 = vld [vmem:[#allocation10 + $0x50] sm:$0xff]
    %v281 = vld [vmem:[#allocation10 + $0x58] sm:$0xff]
    %v282 = vld [vmem:[#allocation10 + $0x60] sm:$0xff]
    %v283 = vld [vmem:[#allocation10 + $0x68] sm:$0xff]
    %v284 = vld [vmem:[#allocation10 + $0x70] sm:$0xff]
    %v285 = vld [vmem:[#allocation10 + $0x78] sm:$0xff]
    %v286 = vld [vmem:[%s8] sm:$0x1]
    %v288 = vperm.slane %v286, 0
    %290 = vmatpush.msra.mxu0 %v285
    %291 = vmatpush.msra.mxu0 %v284
    %292 = vmatpush.msra.mxu0 %v283
    %293 = vmatpush.msra.mxu0 %v282
    %294 = vmatpush.msra.mxu0 %v281
    %295 = vmatpush.msra.mxu0 %v280
    %296 = vmatpush.msra.mxu0 %v279
    %297 = vmatpush.msra.mxu0 %v278
    %298 = vmatpush.msra.mxu0 %v277
    %299 = vmatpush.msra.mxu0 %v276
    %300 = vmatpush.msra.mxu0 %v275
    %301 = vmatpush.msra.mxu0 %v274
    %302 = vmatpush.msra.mxu0 %v273
    %303 = vmatpush.msra.mxu0 %v272
    %304 = vmatpush.msra.mxu0 %v271
    %305 = vmatpush.msra.mxu0 %v270
    %306 = vmatmul.f32.gmra.mxu0 %v268
    %v307 = vpop.f32.mrf.mxu0
    %v308 = vadd.f32 %v288, %v307
    %309 = vmatmul.f32.gmra.mxu0 %v269
    %v310 = vpop.f32.mrf.mxu0
    %v311 = vadd.f32 %v288, %v310
    %312 = vdwg.mxu0
    %v313 = vmax.f32 %v308, 0.0
    %v314 = vmax.f32 %v311, 0.0
    %v315 = vld [vmem:[#allocation11] sm:$0xff]
    %v316 = vld [vmem:[#allocation11 + $0x8] sm:$0xff]
    %v317 = vld [vmem:[#allocation11 + $0x10] sm:$0xff]
    %v318 = vld [vmem:[#allocation11 + $0x18] sm:$0xff]
    %v319 = vld [vmem:[#allocation11 + $0x20] sm:$0xff]
    %v320 = vld [vmem:[#allocation11 + $0x28] sm:$0xff]
    %v321 = vld [vmem:[#allocation11 + $0x30] sm:$0xff]
    %v322 = vld [vmem:[#allocation11 + $0x38] sm:$0xff]
    %v323 = vld [vmem:[#allocation11 + $0x40] sm:$0xff]
    %v324 = vld [vmem:[#allocation11 + $0x48] sm:$0xff]
    %v325 = vld [vmem:[#allocation11 + $0x50] sm:$0xff]
    %v326 = vld [vmem:[#allocation11 + $0x58] sm:$0xff]
    %v327 = vld [vmem:[#allocation11 + $0x60] sm:$0xff]
    %v328 = vld [vmem:[#allocation11 + $0x68] sm:$0xff]
    %v329 = vld [vmem:[#allocation11 + $0x70] sm:$0xff]
    %v330 = vld [vmem:[#allocation11 + $0x78] sm:$0xff]
    %v331 = vld [vmem:[%s10] sm:$0x1]
    %v333 = vperm.slane %v331, 0
    %335 = vmatpush.msra.mxu0 %v330
    %336 = vmatpush.msra.mxu0 %v329
    %337 = vmatpush.msra.mxu0 %v328
    %338 = vmatpush.msra.mxu0 %v327
    %339 = vmatpush.msra.mxu0 %v326
    %340 = vmatpush.msra.mxu0 %v325
    %341 = vmatpush.msra.mxu0 %v324
    %342 = vmatpush.msra.mxu0 %v323
    %343 = vmatpush.msra.mxu0 %v322
    %344 = vmatpush.msra.mxu0 %v321
    %345 = vmatpush.msra.mxu0 %v320
    %346 = vmatpush.msra.mxu0 %v319
    %347 = vmatpush.msra.mxu0 %v318
    %348 = vmatpush.msra.mxu0 %v317
    %349 = vmatpush.msra.mxu0 %v316
    %350 = vmatpush.msra.mxu0 %v315
    %351 = vmatmul.f32.gmra.mxu0 %v313
    %v352 = vpop.f32.mrf.mxu0
    %v353 = vadd.f32 %v333, %v352
    %354 = vmatmul.f32.gmra.mxu0 %v314
    %v355 = vpop.f32.mrf.mxu0
    %v356 = vadd.f32 %v333, %v355
    %357 = vdwg.mxu0
    %v358 = vxor.u32 %v353, 2147483648
    %v359 = vxor.u32 %v356, 2147483648
    %v360 = vmul.f32 %v358, 1.442695
    %v361 = vpow.pop %v360
    %v362 = vmul.f32 %v359, 1.442695
    %v363 = vpow.pop %v362
    %v364 = vadd.f32 %v361, 1.0
    %v365 = vadd.f32 %v363, 1.0
    %v366 = vrcp.pop %v364
    %v367 = vmul.f32 %v364, %v366
    %v368 = vsub.f32 1.0, %v367
    %v369 = vmul.f32 %v366, %v368
    %v370 = vadd.f32 %v366, %v369
    %vm371 = vweird.f32 %v364
    %vm372 = vweird.f32 %v366
    %vm373 = vmor %vm371, %vm372
    %v374 = vsel %vm373, %v366, %v370
    %v375 = vand.u32 2147483647, %v364
    %vm376 = vcmp.eq.f32.partialorder %v375, 8.507059e+37
    %v377 = vand.u32 %v364, 2147483648
    %v378 = vor.u32 1.1754944e-38, %v377
    %v379 = vsel %vm376, %v378, %v374
    %v380 = vmul.f32 1.0, %v379
    %v381 = vrcp.pop %v365
    %v382 = vmul.f32 %v365, %v381
    %v383 = vsub.f32 1.0, %v382
    %v384 = vmul.f32 %v381, %v383
    %v385 = vadd.f32 %v381, %v384
    %vm386 = vweird.f32 %v365
    %vm387 = vweird.f32 %v381
    %vm388 = vmor %vm386, %vm387
    %v389 = vsel %vm388, %v381, %v385
    %v390 = vand.u32 2147483647, %v365
    %vm391 = vcmp.eq.f32.partialorder %v390, 8.507059e+37
    %v392 = vand.u32 %v365, 2147483648
    %v393 = vor.u32 1.1754944e-38, %v392
    %v394 = vsel %vm391, %v393, %v389
    %v395 = vmul.f32 1.0, %v394
    %396 = vst [vmem:[#allocation13] sm:$0xff] %v380
    %397 = vst [vmem:[#allocation13 + $0x8] sm:$0xff] %v395
    // Predicated region
    $region70: #{tpu_custom_call.1} parent=1 // pred_check
      _
    $region71: #{tpu_custom_call.1} parent=1 // pred_check_branch
      %399 = sbr.rel (0) target = $region73
    $region72: #{tpu_custom_call.1} parent=1 // pred_region
      %401 = vsyncadd [#allocation4], 0
      %s402 = sshll.u32 [#allocation13], 4
      %s403 = int_to_ptr.vmem [resolvable:$true] %s402
      %s404 = sshll.u32 %s11, 4
      %s405 = int_to_ptr.hbm [resolvable:$true] %s404
      %410 = dma.vmem_to_hbm [thread:$0]  %s403, 256, %s405, [#allocation4], 128, 128, 8
    $region73: #{tpu_custom_call.1} parent=1 // pred_fallthru
      _
    // Predicated region
    $region74: #{tpu_custom_call.1} parent=1 // pred_check
      _
    $region75: #{tpu_custom_call.1} parent=1 // pred_check_branch
      %412 = sbr.rel (0) target = $region77
    $region76: #{tpu_custom_call.1} parent=1 // pred_region
      %414 = dma.done [#allocation4], 256
    $region77: #{tpu_custom_call.1} parent=1 // pred_fallthru
      _
    %415 = vsyncpa [#allocation3], 1
    %416 = vsyncpa [#allocation6], 1
    %417 = vsyncpa [#allocation9], 1
    %418 = vsyncpa [#allocation12], 1
    %419 = vsyncpa [#allocation4], 1

</llo_original>
